<compile_context>
chip_gen: v7x
topology: tpu7x:2x2x1
jax: 0.10.0
libtpu: 0.0.40
codegen_flags: <defaults>
</compile_context>

<pallas_src>
import jax
import jax.numpy as jnp
from jax.experimental import pallas as pl
from jax.experimental.pallas import tpu as pltpu

B, S, E, H, VOCAB = 2, 8, 32, 32, 100   # small shapes consistent with the module
R = 8                                   # sublane-padded rows per timestep (>= B)


def lstm_classifier_kernel(ids_ref, emb_ref,
                           wih0_ref, whh0_ref, b0_ref,
                           wih1_ref, whh1_ref, b1_ref,
                           wc1_ref, bc1_ref, wc2_ref, bc2_ref,
                           out_ref,
                           xpad_ref):
    hdim = whh0_ref.shape[0]
    n_b = ids_ref.shape[0]
    n_s = ids_ref.shape[1]
    rows = xpad_ref.shape[0] // n_s          # = R (sublane-aligned rows / step)

    # --- in-kernel embedding gather into a sublane-aligned (S*R, E) buffer.
    #     Only rows [t*R, t*R + B) are valid; padded rows are row-wise
    #     independent through every op below and never read back.
    xpad_ref[...] = jnp.zeros_like(xpad_ref)
    for t in range(n_s):
        for b in range(n_b):
            row = t * rows + b
            xpad_ref[row:row + 1, :] = emb_ref[pl.ds(ids_ref[b, t], 1), :]

    # --- hoisted layer-0 input projection: one (S*R, E) x (E, 4H) MXU pass,
    #     bias b0 (= b_ih0 + b_hh0) folded in (PyTorch gate order i,f,g,o).
    xproj0 = (jnp.dot(xpad_ref[...].astype(jnp.bfloat16), wih0_ref[...],
                      preferred_element_type=jnp.float32)
              + b0_ref[...])                                   # (S*R, 4H) f32

    # --- hoisted layer-1 bias broadcast (JAX does not CSE broadcast_in_dim)
    b1b = jnp.broadcast_to(b1_ref[...], (rows, 4 * hdim))      # (R, 4H) f32

    def activate(gates, c, first):
        # whole-vreg sigmoid + one tanh on the g slice; all state math f32.
        sa = jax.nn.sigmoid(gates)
        i = sa[:, 0 * hdim:1 * hdim]
        o = sa[:, 3 * hdim:4 * hdim]
        g = jnp.tanh(gates[:, 2 * hdim:3 * hdim])
        if first:                      # c == 0: skip the f*c term entirely
            c_new = i * g
        else:
            f = sa[:, 1 * hdim:2 * hdim]
            c_new = f * c + i * g
        h_new = o * jnp.tanh(c_new)
        return h_new, c_new

    h0 = c0 = h1 = c1 = None
    h0_bf = h1_bf = None

    # Fully unrolled time loop (S is static & tiny): static vreg-aligned
    # slices, split layer-1 dots so h1@W_hh1 can issue ahead of layer 0.
    for t in range(n_s):
        xp0 = xproj0[t * rows:(t + 1) * rows, :]               # whole-vreg slice

        # layer 0 --------------------------------------------------------
        if t == 0:                      # h0 == 0: skip the recurrent matmul
            gates0 = xp0
        else:
            gates0 = xp0 + jnp.dot(h0_bf, whh0_ref[...],
                                   preferred_element_type=jnp.float32)
        h0, c0 = activate(gates0, c0, first=(t == 0))
        h0_bf = h0.astype(jnp.bfloat16)

        # layer 1 --------------------------------------------------------
        gih1 = jnp.dot(h0_bf, wih1_ref[...],
                       preferred_element_type=jnp.float32)     # needs h0(t)
        if t == 0:                      # h1 == 0: skip the recurrent matmul
            gates1 = gih1 + b1b
        else:
            ghh1 = jnp.dot(h1_bf, whh1_ref[...],
                           preferred_element_type=jnp.float32)  # only h1(t-1)
            gates1 = gih1 + ghh1 + b1b
        h1, c1 = activate(gates1, c1, first=(t == 0))
        h1_bf = h1.astype(jnp.bfloat16)

    # classifier: Linear(H,H) -> ReLU -> [Dropout(0.3): identity in eval]
    #             -> Linear(H,1) on the VPU (mul) + XLU (lane reduce).
    hid = jnp.maximum(
        jnp.dot(h1_bf, wc1_ref[...], preferred_element_type=jnp.float32)
        + bc1_ref[...],
        0.0)
    outv = (jnp.sum(hid * wc2_ref[...], axis=-1, keepdims=True)
            + bc2_ref[...])                                    # (R, 1)
    out_ref[...] = outv[0:n_b, :]                              # valid rows only


def init_params(key):
    ks = jax.random.split(key, 12)
    scale = 1.0 / jnp.sqrt(jnp.float32(H))
    u = lambda k, shape: jax.random.uniform(k, shape, jnp.float32, -scale, scale)
    bf = lambda x: x.astype(jnp.bfloat16)          # bf16 copies made ONCE here
    return {
        "embedding": u(ks[0], (VOCAB, E)),         # synthetic "BERT" table (f32)
        # LSTM layer 0 (input=E, hidden=H), PyTorch gate order i,f,g,o;
        # weights stored transposed (in_features, out_features), bf16 for MXU.
        "wih0": bf(u(ks[1], (E, 4 * H))),
        "whh0": bf(u(ks[2], (H, 4 * H))),
        "b0": u(ks[3], (1, 4 * H)) + u(ks[4], (1, 4 * H)),     # b_ih + b_hh
        # LSTM layer 1 (input=H, hidden=H)
        "wih1": bf(u(ks[5], (H, 4 * H))),
        "whh1": bf(u(ks[6], (H, 4 * H))),
        "b1": u(ks[7], (1, 4 * H)) + u(ks[8], (1, 4 * H)),
        # classifier head
        "wc1": bf(u(ks[9], (H, H))),
        "bc1": u(ks[10], (1, H)),
        "wc2_row": u(ks[11], (1, H)),              # final Linear(H,1) as a row
        "bc2": jnp.zeros((1, 1), jnp.float32),
    }


def lstm_torch_nn_forward(input_ids, params):
    vmem = pl.BlockSpec(memory_space=pltpu.MemorySpace.VMEM)
    smem = pl.BlockSpec(memory_space=pltpu.MemorySpace.SMEM)
    args = (input_ids,                              # (B, S) int32 -> SMEM
            params["embedding"],
            params["wih0"], params["whh0"], params["b0"],
            params["wih1"], params["whh1"], params["b1"],
            params["wc1"], params["bc1"], params["wc2_row"], params["bc2"])
    out = pl.pallas_call(
        lstm_classifier_kernel,
        out_shape=jax.ShapeDtypeStruct((B, 1), jnp.float32),
        in_specs=[smem] + [vmem] * (len(args) - 1),
        out_specs=vmem,
        scratch_shapes=[pltpu.VMEM((S * R, E), jnp.float32)],  # gathered x
    )(*args)
    return out[:, 0]                                # .squeeze(-1) -> (B,)


if __name__ == "__main__":
    key = jax.random.PRNGKey(0)
    k_param, k_ids = jax.random.split(key)
    params = init_params(k_param)
    input_ids = jax.random.randint(k_ids, (B, S), 0, VOCAB, dtype=jnp.int32)

    fwd = jax.jit(lstm_torch_nn_forward)
    out = fwd(input_ids, params)
    jax.block_until_ready(out)
    assert out.shape == (B,) and out.dtype == jnp.float32
    assert bool(jnp.all(jnp.isfinite(out)))
    print("KERNEL_OK")
</pallas_src>

<mosaic_0001>
module attributes {stable_mosaic.version = 11 : i64} {
  func.func @lstm_classifier_kernel(%arg0: memref<2x8xi32, #tpu.memory_space<smem>>, %arg1: memref<100x32xf32, #tpu.memory_space<vmem>>, %arg2: memref<32x128xbf16, #tpu.memory_space<vmem>>, %arg3: memref<32x128xbf16, #tpu.memory_space<vmem>>, %arg4: memref<1x128xf32, #tpu.memory_space<vmem>>, %arg5: memref<32x128xbf16, #tpu.memory_space<vmem>>, %arg6: memref<32x128xbf16, #tpu.memory_space<vmem>>, %arg7: memref<1x128xf32, #tpu.memory_space<vmem>>, %arg8: memref<32x32xbf16, #tpu.memory_space<vmem>>, %arg9: memref<1x32xf32, #tpu.memory_space<vmem>>, %arg10: memref<1x32xf32, #tpu.memory_space<vmem>>, %arg11: memref<1x1xf32, #tpu.memory_space<vmem>>, %arg12: memref<2x1xf32, #tpu.memory_space<vmem>>, %arg13: memref<64x32xf32, #tpu.memory_space<vmem>>) attributes {dimension_semantics = [], scalar_prefetch = 0 : i64, scratch_operands = 1 : i64, tpu.core_type = #tpu.core_type<tc>} {
    %cst = arith.constant 0.000000e+00 : f32
    %0 = vector.broadcast %cst : f32 to vector<64x32xf32>
    %c0 = arith.constant 0 : index
    %c0_0 = arith.constant 0 : index
    %1 = vector.load %arg13[%c0, %c0_0] : memref<64x32xf32, #tpu.memory_space<vmem>>, vector<64x32xf32>
    tpu.vector_store %arg13[%c0, %c0_0], %0 {strides = array<i32>} : memref<64x32xf32, #tpu.memory_space<vmem>>, vector<64x32xf32>,
    %c0_1 = arith.constant 0 : index
    %c0_2 = arith.constant 0 : index
    %2 = memref.load %arg0[%c0_1, %c0_2] : memref<2x8xi32, #tpu.memory_space<smem>>
    %3 = arith.index_cast %2 : i32 to index
    %c0_3 = arith.constant 0 : index
    %4 = vector.load %arg1[%3, %c0_3] : memref<100x32xf32, #tpu.memory_space<vmem>>, vector<1x32xf32>
    %c0_4 = arith.constant 0 : index
    %c0_5 = arith.constant 0 : index
    %5 = vector.load %arg13[%c0_4, %c0_5] : memref<64x32xf32, #tpu.memory_space<vmem>>, vector<1x32xf32>
    tpu.vector_store %arg13[%c0_4, %c0_5], %4 {strides = array<i32>} : memref<64x32xf32, #tpu.memory_space<vmem>>, vector<1x32xf32>,
    %c1 = arith.constant 1 : index
    %c0_6 = arith.constant 0 : index
    %6 = memref.load %arg0[%c1, %c0_6] : memref<2x8xi32, #tpu.memory_space<smem>>
    %7 = arith.index_cast %6 : i32 to index
    %c0_7 = arith.constant 0 : index
    %8 = vector.load %arg1[%7, %c0_7] : memref<100x32xf32, #tpu.memory_space<vmem>>, vector<1x32xf32>
    %c1_8 = arith.constant 1 : index
    %c0_9 = arith.constant 0 : index
    %9 = vector.load %arg13[%c1_8, %c0_9] : memref<64x32xf32, #tpu.memory_space<vmem>>, vector<1x32xf32>
    tpu.vector_store %arg13[%c1_8, %c0_9], %8 {strides = array<i32>} : memref<64x32xf32, #tpu.memory_space<vmem>>, vector<1x32xf32>,
    %c0_10 = arith.constant 0 : index
    %c1_11 = arith.constant 1 : index
    %10 = memref.load %arg0[%c0_10, %c1_11] : memref<2x8xi32, #tpu.memory_space<smem>>
    %11 = arith.index_cast %10 : i32 to index
    %c0_12 = arith.constant 0 : index
    %12 = vector.load %arg1[%11, %c0_12] : memref<100x32xf32, #tpu.memory_space<vmem>>, vector<1x32xf32>
    %c8 = arith.constant 8 : index
    %c0_13 = arith.constant 0 : index
    %13 = vector.load %arg13[%c8, %c0_13] : memref<64x32xf32, #tpu.memory_space<vmem>>, vector<1x32xf32>
    tpu.vector_store %arg13[%c8, %c0_13], %12 {strides = array<i32>} : memref<64x32xf32, #tpu.memory_space<vmem>>, vector<1x32xf32>,
    %c1_14 = arith.constant 1 : index
    %c1_15 = arith.constant 1 : index
    %14 = memref.load %arg0[%c1_14, %c1_15] : memref<2x8xi32, #tpu.memory_space<smem>>
    %15 = arith.index_cast %14 : i32 to index
    %c0_16 = arith.constant 0 : index
    %16 = vector.load %arg1[%15, %c0_16] : memref<100x32xf32, #tpu.memory_space<vmem>>, vector<1x32xf32>
    %c9 = arith.constant 9 : index
    %c0_17 = arith.constant 0 : index
    %17 = vector.load %arg13[%c9, %c0_17] : memref<64x32xf32, #tpu.memory_space<vmem>>, vector<1x32xf32>
    tpu.vector_store %arg13[%c9, %c0_17], %16 {strides = array<i32>} : memref<64x32xf32, #tpu.memory_space<vmem>>, vector<1x32xf32>,
    %c0_18 = arith.constant 0 : index
    %c2 = arith.constant 2 : index
    %18 = memref.load %arg0[%c0_18, %c2] : memref<2x8xi32, #tpu.memory_space<smem>>
    %19 = arith.index_cast %18 : i32 to index
    %c0_19 = arith.constant 0 : index
    %20 = vector.load %arg1[%19, %c0_19] : memref<100x32xf32, #tpu.memory_space<vmem>>, vector<1x32xf32>
    %c16 = arith.constant 16 : index
    %c0_20 = arith.constant 0 : index
    %21 = vector.load %arg13[%c16, %c0_20] : memref<64x32xf32, #tpu.memory_space<vmem>>, vector<1x32xf32>
    tpu.vector_store %arg13[%c16, %c0_20], %20 {strides = array<i32>} : memref<64x32xf32, #tpu.memory_space<vmem>>, vector<1x32xf32>,
    %c1_21 = arith.constant 1 : index
    %c2_22 = arith.constant 2 : index
    %22 = memref.load %arg0[%c1_21, %c2_22] : memref<2x8xi32, #tpu.memory_space<smem>>
    %23 = arith.index_cast %22 : i32 to index
    %c0_23 = arith.constant 0 : index
    %24 = vector.load %arg1[%23, %c0_23] : memref<100x32xf32, #tpu.memory_space<vmem>>, vector<1x32xf32>
    %c17 = arith.constant 17 : index
    %c0_24 = arith.constant 0 : index
    %25 = vector.load %arg13[%c17, %c0_24] : memref<64x32xf32, #tpu.memory_space<vmem>>, vector<1x32xf32>
    tpu.vector_store %arg13[%c17, %c0_24], %24 {strides = array<i32>} : memref<64x32xf32, #tpu.memory_space<vmem>>, vector<1x32xf32>,
    %c0_25 = arith.constant 0 : index
    %c3 = arith.constant 3 : index
    %26 = memref.load %arg0[%c0_25, %c3] : memref<2x8xi32, #tpu.memory_space<smem>>
    %27 = arith.index_cast %26 : i32 to index
    %c0_26 = arith.constant 0 : index
    %28 = vector.load %arg1[%27, %c0_26] : memref<100x32xf32, #tpu.memory_space<vmem>>, vector<1x32xf32>
    %c24 = arith.constant 24 : index
    %c0_27 = arith.constant 0 : index
    %29 = vector.load %arg13[%c24, %c0_27] : memref<64x32xf32, #tpu.memory_space<vmem>>, vector<1x32xf32>
    tpu.vector_store %arg13[%c24, %c0_27], %28 {strides = array<i32>} : memref<64x32xf32, #tpu.memory_space<vmem>>, vector<1x32xf32>,
    %c1_28 = arith.constant 1 : index
    %c3_29 = arith.constant 3 : index
    %30 = memref.load %arg0[%c1_28, %c3_29] : memref<2x8xi32, #tpu.memory_space<smem>>
    %31 = arith.index_cast %30 : i32 to index
    %c0_30 = arith.constant 0 : index
    %32 = vector.load %arg1[%31, %c0_30] : memref<100x32xf32, #tpu.memory_space<vmem>>, vector<1x32xf32>
    %c25 = arith.constant 25 : index
    %c0_31 = arith.constant 0 : index
    %33 = vector.load %arg13[%c25, %c0_31] : memref<64x32xf32, #tpu.memory_space<vmem>>, vector<1x32xf32>
    tpu.vector_store %arg13[%c25, %c0_31], %32 {strides = array<i32>} : memref<64x32xf32, #tpu.memory_space<vmem>>, vector<1x32xf32>,
    %c0_32 = arith.constant 0 : index
    %c4 = arith.constant 4 : index
    %34 = memref.load %arg0[%c0_32, %c4] : memref<2x8xi32, #tpu.memory_space<smem>>
    %35 = arith.index_cast %34 : i32 to index
    %c0_33 = arith.constant 0 : index
    %36 = vector.load %arg1[%35, %c0_33] : memref<100x32xf32, #tpu.memory_space<vmem>>, vector<1x32xf32>
    %c32 = arith.constant 32 : index
    %c0_34 = arith.constant 0 : index
    %37 = vector.load %arg13[%c32, %c0_34] : memref<64x32xf32, #tpu.memory_space<vmem>>, vector<1x32xf32>
    tpu.vector_store %arg13[%c32, %c0_34], %36 {strides = array<i32>} : memref<64x32xf32, #tpu.memory_space<vmem>>, vector<1x32xf32>,
    %c1_35 = arith.constant 1 : index
    %c4_36 = arith.constant 4 : index
    %38 = memref.load %arg0[%c1_35, %c4_36] : memref<2x8xi32, #tpu.memory_space<smem>>
    %39 = arith.index_cast %38 : i32 to index
    %c0_37 = arith.constant 0 : index
    %40 = vector.load %arg1[%39, %c0_37] : memref<100x32xf32, #tpu.memory_space<vmem>>, vector<1x32xf32>
    %c33 = arith.constant 33 : index
    %c0_38 = arith.constant 0 : index
    %41 = vector.load %arg13[%c33, %c0_38] : memref<64x32xf32, #tpu.memory_space<vmem>>, vector<1x32xf32>
    tpu.vector_store %arg13[%c33, %c0_38], %40 {strides = array<i32>} : memref<64x32xf32, #tpu.memory_space<vmem>>, vector<1x32xf32>,
    %c0_39 = arith.constant 0 : index
    %c5 = arith.constant 5 : index
    %42 = memref.load %arg0[%c0_39, %c5] : memref<2x8xi32, #tpu.memory_space<smem>>
    %43 = arith.index_cast %42 : i32 to index
    %c0_40 = arith.constant 0 : index
    %44 = vector.load %arg1[%43, %c0_40] : memref<100x32xf32, #tpu.memory_space<vmem>>, vector<1x32xf32>
    %c40 = arith.constant 40 : index
    %c0_41 = arith.constant 0 : index
    %45 = vector.load %arg13[%c40, %c0_41] : memref<64x32xf32, #tpu.memory_space<vmem>>, vector<1x32xf32>
    tpu.vector_store %arg13[%c40, %c0_41], %44 {strides = array<i32>} : memref<64x32xf32, #tpu.memory_space<vmem>>, vector<1x32xf32>,
    %c1_42 = arith.constant 1 : index
    %c5_43 = arith.constant 5 : index
    %46 = memref.load %arg0[%c1_42, %c5_43] : memref<2x8xi32, #tpu.memory_space<smem>>
    %47 = arith.index_cast %46 : i32 to index
    %c0_44 = arith.constant 0 : index
    %48 = vector.load %arg1[%47, %c0_44] : memref<100x32xf32, #tpu.memory_space<vmem>>, vector<1x32xf32>
    %c41 = arith.constant 41 : index
    %c0_45 = arith.constant 0 : index
    %49 = vector.load %arg13[%c41, %c0_45] : memref<64x32xf32, #tpu.memory_space<vmem>>, vector<1x32xf32>
    tpu.vector_store %arg13[%c41, %c0_45], %48 {strides = array<i32>} : memref<64x32xf32, #tpu.memory_space<vmem>>, vector<1x32xf32>,
    %c0_46 = arith.constant 0 : index
    %c6 = arith.constant 6 : index
    %50 = memref.load %arg0[%c0_46, %c6] : memref<2x8xi32, #tpu.memory_space<smem>>
    %51 = arith.index_cast %50 : i32 to index
    %c0_47 = arith.constant 0 : index
    %52 = vector.load %arg1[%51, %c0_47] : memref<100x32xf32, #tpu.memory_space<vmem>>, vector<1x32xf32>
    %c48 = arith.constant 48 : index
    %c0_48 = arith.constant 0 : index
    %53 = vector.load %arg13[%c48, %c0_48] : memref<64x32xf32, #tpu.memory_space<vmem>>, vector<1x32xf32>
    tpu.vector_store %arg13[%c48, %c0_48], %52 {strides = array<i32>} : memref<64x32xf32, #tpu.memory_space<vmem>>, vector<1x32xf32>,
    %c1_49 = arith.constant 1 : index
    %c6_50 = arith.constant 6 : index
    %54 = memref.load %arg0[%c1_49, %c6_50] : memref<2x8xi32, #tpu.memory_space<smem>>
    %55 = arith.index_cast %54 : i32 to index
    %c0_51 = arith.constant 0 : index
    %56 = vector.load %arg1[%55, %c0_51] : memref<100x32xf32, #tpu.memory_space<vmem>>, vector<1x32xf32>
    %c49 = arith.constant 49 : index
    %c0_52 = arith.constant 0 : index
    %57 = vector.load %arg13[%c49, %c0_52] : memref<64x32xf32, #tpu.memory_space<vmem>>, vector<1x32xf32>
    tpu.vector_store %arg13[%c49, %c0_52], %56 {strides = array<i32>} : memref<64x32xf32, #tpu.memory_space<vmem>>, vector<1x32xf32>,
    %c0_53 = arith.constant 0 : index
    %c7 = arith.constant 7 : index
    %58 = memref.load %arg0[%c0_53, %c7] : memref<2x8xi32, #tpu.memory_space<smem>>
    %59 = arith.index_cast %58 : i32 to index
    %c0_54 = arith.constant 0 : index
    %60 = vector.load %arg1[%59, %c0_54] : memref<100x32xf32, #tpu.memory_space<vmem>>, vector<1x32xf32>
    %c56 = arith.constant 56 : index
    %c0_55 = arith.constant 0 : index
    %61 = vector.load %arg13[%c56, %c0_55] : memref<64x32xf32, #tpu.memory_space<vmem>>, vector<1x32xf32>
    tpu.vector_store %arg13[%c56, %c0_55], %60 {strides = array<i32>} : memref<64x32xf32, #tpu.memory_space<vmem>>, vector<1x32xf32>,
    %c1_56 = arith.constant 1 : index
    %c7_57 = arith.constant 7 : index
    %62 = memref.load %arg0[%c1_56, %c7_57] : memref<2x8xi32, #tpu.memory_space<smem>>
    %63 = arith.index_cast %62 : i32 to index
    %c0_58 = arith.constant 0 : index
    %64 = vector.load %arg1[%63, %c0_58] : memref<100x32xf32, #tpu.memory_space<vmem>>, vector<1x32xf32>
    %c57 = arith.constant 57 : index
    %c0_59 = arith.constant 0 : index
    %65 = vector.load %arg13[%c57, %c0_59] : memref<64x32xf32, #tpu.memory_space<vmem>>, vector<1x32xf32>
    tpu.vector_store %arg13[%c57, %c0_59], %64 {strides = array<i32>} : memref<64x32xf32, #tpu.memory_space<vmem>>, vector<1x32xf32>,
    %c0_60 = arith.constant 0 : index
    %c0_61 = arith.constant 0 : index
    %66 = vector.load %arg13[%c0_60, %c0_61] : memref<64x32xf32, #tpu.memory_space<vmem>>, vector<64x32xf32>
    %67 = arith.truncf %66 : vector<64x32xf32> to vector<64x32xbf16>
    %c0_62 = arith.constant 0 : index
    %c0_63 = arith.constant 0 : index
    %68 = vector.load %arg2[%c0_62, %c0_63] : memref<32x128xbf16, #tpu.memory_space<vmem>>, vector<32x128xbf16>
    %cst_64 = arith.constant dense<0.000000e+00> : vector<64x128xf32>
    %69 = tpu.matmul %67, %68, %cst_64 {dimension_numbers = #tpu.dot_dimension_numbers<[1], [0], [0], [1], [0, 0, 1, 1], [], []>} : vector<64x32xbf16>, vector<32x128xbf16>, vector<64x128xf32> -> vector<64x128xf32>
    %c0_65 = arith.constant 0 : index
    %c0_66 = arith.constant 0 : index
    %70 = vector.load %arg4[%c0_65, %c0_66] : memref<1x128xf32, #tpu.memory_space<vmem>>, vector<1x128xf32>
    %71 = vector.broadcast %70 : vector<1x128xf32> to vector<64x128xf32>
    %72 = arith.addf %69, %71 : vector<64x128xf32>
    %c0_67 = arith.constant 0 : index
    %c0_68 = arith.constant 0 : index
    %73 = vector.load %arg7[%c0_67, %c0_68] : memref<1x128xf32, #tpu.memory_space<vmem>>, vector<1x128xf32>
    %74 = vector.shape_cast %73 : vector<1x128xf32> to vector<1x128xf32>
    %75 = vector.broadcast %74 : vector<1x128xf32> to vector<8x128xf32>
    %76 = vector.extract_strided_slice %72 {offsets = [0, 0], sizes = [8, 128], strides = [1, 1]} : vector<64x128xf32> to vector<8x128xf32>
    %77 = arith.negf %76 : vector<8x128xf32>
    %78 = math.exp %77 : vector<8x128xf32>
    %cst_69 = arith.constant 1.000000e+00 : f32
    %79 = vector.broadcast %cst_69 : f32 to vector<8x128xf32>
    %80 = arith.addf %79, %78 : vector<8x128xf32>
    %81 = arith.divf %79, %80 : vector<8x128xf32>
    %82 = vector.extract_strided_slice %81 {offsets = [0, 0], sizes = [8, 32], strides = [1, 1]} : vector<8x128xf32> to vector<8x32xf32>
    %83 = vector.extract_strided_slice %81 {offsets = [0, 96], sizes = [8, 32], strides = [1, 1]} : vector<8x128xf32> to vector<8x32xf32>
    %84 = vector.extract_strided_slice %76 {offsets = [0, 64], sizes = [8, 32], strides = [1, 1]} : vector<8x128xf32> to vector<8x32xf32>
    %85 = math.tanh %84 : vector<8x32xf32>
    %86 = arith.mulf %82, %85 : vector<8x32xf32>
    %87 = math.tanh %86 : vector<8x32xf32>
    %88 = arith.mulf %83, %87 : vector<8x32xf32>
    %89 = arith.truncf %88 : vector<8x32xf32> to vector<8x32xbf16>
    %c0_70 = arith.constant 0 : index
    %c0_71 = arith.constant 0 : index
    %90 = vector.load %arg5[%c0_70, %c0_71] : memref<32x128xbf16, #tpu.memory_space<vmem>>, vector<32x128xbf16>
    %cst_72 = arith.constant dense<0.000000e+00> : vector<8x128xf32>
    %91 = tpu.matmul %89, %90, %cst_72 {dimension_numbers = #tpu.dot_dimension_numbers<[1], [0], [0], [1], [0, 0, 1, 1], [], []>} : vector<8x32xbf16>, vector<32x128xbf16>, vector<8x128xf32> -> vector<8x128xf32>
    %92 = arith.addf %91, %75 : vector<8x128xf32>
    %93 = arith.negf %92 : vector<8x128xf32>
    %94 = math.exp %93 : vector<8x128xf32>
    %cst_73 = arith.constant 1.000000e+00 : f32
    %95 = vector.broadcast %cst_73 : f32 to vector<8x128xf32>
    %96 = arith.addf %95, %94 : vector<8x128xf32>
    %97 = arith.divf %95, %96 : vector<8x128xf32>
    %98 = vector.extract_strided_slice %97 {offsets = [0, 0], sizes = [8, 32], strides = [1, 1]} : vector<8x128xf32> to vector<8x32xf32>
    %99 = vector.extract_strided_slice %97 {offsets = [0, 96], sizes = [8, 32], strides = [1, 1]} : vector<8x128xf32> to vector<8x32xf32>
    %100 = vector.extract_strided_slice %92 {offsets = [0, 64], sizes = [8, 32], strides = [1, 1]} : vector<8x128xf32> to vector<8x32xf32>
    %101 = math.tanh %100 : vector<8x32xf32>
    %102 = arith.mulf %98, %101 : vector<8x32xf32>
    %103 = math.tanh %102 : vector<8x32xf32>
    %104 = arith.mulf %99, %103 : vector<8x32xf32>
    %105 = arith.truncf %104 : vector<8x32xf32> to vector<8x32xbf16>
    %106 = vector.extract_strided_slice %72 {offsets = [8, 0], sizes = [8, 128], strides = [1, 1]} : vector<64x128xf32> to vector<8x128xf32>
    %c0_74 = arith.constant 0 : index
    %c0_75 = arith.constant 0 : index
    %107 = vector.load %arg3[%c0_74, %c0_75] : memref<32x128xbf16, #tpu.memory_space<vmem>>, vector<32x128xbf16>
    %cst_76 = arith.constant dense<0.000000e+00> : vector<8x128xf32>
    %108 = tpu.matmul %89, %107, %cst_76 {dimension_numbers = #tpu.dot_dimension_numbers<[1], [0], [0], [1], [0, 0, 1, 1], [], []>} : vector<8x32xbf16>, vector<32x128xbf16>, vector<8x128xf32> -> vector<8x128xf32>
    %109 = arith.addf %106, %108 : vector<8x128xf32>
    %110 = arith.negf %109 : vector<8x128xf32>
    %111 = math.exp %110 : vector<8x128xf32>
    %cst_77 = arith.constant 1.000000e+00 : f32
    %112 = vector.broadcast %cst_77 : f32 to vector<8x128xf32>
    %113 = arith.addf %112, %111 : vector<8x128xf32>
    %114 = arith.divf %112, %113 : vector<8x128xf32>
    %115 = vector.extract_strided_slice %114 {offsets = [0, 0], sizes = [8, 32], strides = [1, 1]} : vector<8x128xf32> to vector<8x32xf32>
    %116 = vector.extract_strided_slice %114 {offsets = [0, 96], sizes = [8, 32], strides = [1, 1]} : vector<8x128xf32> to vector<8x32xf32>
    %117 = vector.extract_strided_slice %109 {offsets = [0, 64], sizes = [8, 32], strides = [1, 1]} : vector<8x128xf32> to vector<8x32xf32>
    %118 = math.tanh %117 : vector<8x32xf32>
    %119 = vector.extract_strided_slice %114 {offsets = [0, 32], sizes = [8, 32], strides = [1, 1]} : vector<8x128xf32> to vector<8x32xf32>
    %120 = arith.mulf %119, %86 : vector<8x32xf32>
    %121 = arith.mulf %115, %118 : vector<8x32xf32>
    %122 = arith.addf %120, %121 : vector<8x32xf32>
    %123 = math.tanh %122 : vector<8x32xf32>
    %124 = arith.mulf %116, %123 : vector<8x32xf32>
    %125 = arith.truncf %124 : vector<8x32xf32> to vector<8x32xbf16>
    %c0_78 = arith.constant 0 : index
    %c0_79 = arith.constant 0 : index
    %126 = vector.load %arg5[%c0_78, %c0_79] : memref<32x128xbf16, #tpu.memory_space<vmem>>, vector<32x128xbf16>
    %cst_80 = arith.constant dense<0.000000e+00> : vector<8x128xf32>
    %127 = tpu.matmul %125, %126, %cst_80 {dimension_numbers = #tpu.dot_dimension_numbers<[1], [0], [0], [1], [0, 0, 1, 1], [], []>} : vector<8x32xbf16>, vector<32x128xbf16>, vector<8x128xf32> -> vector<8x128xf32>
    %c0_81 = arith.constant 0 : index
    %c0_82 = arith.constant 0 : index
    %128 = vector.load %arg6[%c0_81, %c0_82] : memref<32x128xbf16, #tpu.memory_space<vmem>>, vector<32x128xbf16>
    %cst_83 = arith.constant dense<0.000000e+00> : vector<8x128xf32>
    %129 = tpu.matmul %105, %128, %cst_83 {dimension_numbers = #tpu.dot_dimension_numbers<[1], [0], [0], [1], [0, 0, 1, 1], [], []>} : vector<8x32xbf16>, vector<32x128xbf16>, vector<8x128xf32> -> vector<8x128xf32>
    %130 = arith.addf %127, %129 : vector<8x128xf32>
    %131 = arith.addf %130, %75 : vector<8x128xf32>
    %132 = arith.negf %131 : vector<8x128xf32>
    %133 = math.exp %132 : vector<8x128xf32>
    %cst_84 = arith.constant 1.000000e+00 : f32
    %134 = vector.broadcast %cst_84 : f32 to vector<8x128xf32>
    %135 = arith.addf %134, %133 : vector<8x128xf32>
    %136 = arith.divf %134, %135 : vector<8x128xf32>
    %137 = vector.extract_strided_slice %136 {offsets = [0, 0], sizes = [8, 32], strides = [1, 1]} : vector<8x128xf32> to vector<8x32xf32>
    %138 = vector.extract_strided_slice %136 {offsets = [0, 96], sizes = [8, 32], strides = [1, 1]} : vector<8x128xf32> to vector<8x32xf32>
    %139 = vector.extract_strided_slice %131 {offsets = [0, 64], sizes = [8, 32], strides = [1, 1]} : vector<8x128xf32> to vector<8x32xf32>
    %140 = math.tanh %139 : vector<8x32xf32>
    %141 = vector.extract_strided_slice %136 {offsets = [0, 32], sizes = [8, 32], strides = [1, 1]} : vector<8x128xf32> to vector<8x32xf32>
    %142 = arith.mulf %141, %102 : vector<8x32xf32>
    %143 = arith.mulf %137, %140 : vector<8x32xf32>
    %144 = arith.addf %142, %143 : vector<8x32xf32>
    %145 = math.tanh %144 : vector<8x32xf32>
    %146 = arith.mulf %138, %145 : vector<8x32xf32>
    %147 = arith.truncf %146 : vector<8x32xf32> to vector<8x32xbf16>
    %148 = vector.extract_strided_slice %72 {offsets = [16, 0], sizes = [8, 128], strides = [1, 1]} : vector<64x128xf32> to vector<8x128xf32>
    %c0_85 = arith.constant 0 : index
    %c0_86 = arith.constant 0 : index
    %149 = vector.load %arg3[%c0_85, %c0_86] : memref<32x128xbf16, #tpu.memory_space<vmem>>, vector<32x128xbf16>
    %cst_87 = arith.constant dense<0.000000e+00> : vector<8x128xf32>
    %150 = tpu.matmul %125, %149, %cst_87 {dimension_numbers = #tpu.dot_dimension_numbers<[1], [0], [0], [1], [0, 0, 1, 1], [], []>} : vector<8x32xbf16>, vector<32x128xbf16>, vector<8x128xf32> -> vector<8x128xf32>
    %151 = arith.addf %148, %150 : vector<8x128xf32>
    %152 = arith.negf %151 : vector<8x128xf32>
    %153 = math.exp %152 : vector<8x128xf32>
    %cst_88 = arith.constant 1.000000e+00 : f32
    %154 = vector.broadcast %cst_88 : f32 to vector<8x128xf32>
    %155 = arith.addf %154, %153 : vector<8x128xf32>
    %156 = arith.divf %154, %155 : vector<8x128xf32>
    %157 = vector.extract_strided_slice %156 {offsets = [0, 0], sizes = [8, 32], strides = [1, 1]} : vector<8x128xf32> to vector<8x32xf32>
    %158 = vector.extract_strided_slice %156 {offsets = [0, 96], sizes = [8, 32], strides = [1, 1]} : vector<8x128xf32> to vector<8x32xf32>
    %159 = vector.extract_strided_slice %151 {offsets = [0, 64], sizes = [8, 32], strides = [1, 1]} : vector<8x128xf32> to vector<8x32xf32>
    %160 = math.tanh %159 : vector<8x32xf32>
    %161 = vector.extract_strided_slice %156 {offsets = [0, 32], sizes = [8, 32], strides = [1, 1]} : vector<8x128xf32> to vector<8x32xf32>
    %162 = arith.mulf %161, %122 : vector<8x32xf32>
    %163 = arith.mulf %157, %160 : vector<8x32xf32>
    %164 = arith.addf %162, %163 : vector<8x32xf32>
    %165 = math.tanh %164 : vector<8x32xf32>
    %166 = arith.mulf %158, %165 : vector<8x32xf32>
    %167 = arith.truncf %166 : vector<8x32xf32> to vector<8x32xbf16>
    %c0_89 = arith.constant 0 : index
    %c0_90 = arith.constant 0 : index
    %168 = vector.load %arg5[%c0_89, %c0_90] : memref<32x128xbf16, #tpu.memory_space<vmem>>, vector<32x128xbf16>
    %cst_91 = arith.constant dense<0.000000e+00> : vector<8x128xf32>
    %169 = tpu.matmul %167, %168, %cst_91 {dimension_numbers = #tpu.dot_dimension_numbers<[1], [0], [0], [1], [0, 0, 1, 1], [], []>} : vector<8x32xbf16>, vector<32x128xbf16>, vector<8x128xf32> -> vector<8x128xf32>
    %c0_92 = arith.constant 0 : index
    %c0_93 = arith.constant 0 : index
    %170 = vector.load %arg6[%c0_92, %c0_93] : memref<32x128xbf16, #tpu.memory_space<vmem>>, vector<32x128xbf16>
    %cst_94 = arith.constant dense<0.000000e+00> : vector<8x128xf32>
    %171 = tpu.matmul %147, %170, %cst_94 {dimension_numbers = #tpu.dot_dimension_numbers<[1], [0], [0], [1], [0, 0, 1, 1], [], []>} : vector<8x32xbf16>, vector<32x128xbf16>, vector<8x128xf32> -> vector<8x128xf32>
    %172 = arith.addf %169, %171 : vector<8x128xf32>
    %173 = arith.addf %172, %75 : vector<8x128xf32>
    %174 = arith.negf %173 : vector<8x128xf32>
    %175 = math.exp %174 : vector<8x128xf32>
    %cst_95 = arith.constant 1.000000e+00 : f32
    %176 = vector.broadcast %cst_95 : f32 to vector<8x128xf32>
    %177 = arith.addf %176, %175 : vector<8x128xf32>
    %178 = arith.divf %176, %177 : vector<8x128xf32>
    %179 = vector.extract_strided_slice %178 {offsets = [0, 0], sizes = [8, 32], strides = [1, 1]} : vector<8x128xf32> to vector<8x32xf32>
    %180 = vector.extract_strided_slice %178 {offsets = [0, 96], sizes = [8, 32], strides = [1, 1]} : vector<8x128xf32> to vector<8x32xf32>
    %181 = vector.extract_strided_slice %173 {offsets = [0, 64], sizes = [8, 32], strides = [1, 1]} : vector<8x128xf32> to vector<8x32xf32>
    %182 = math.tanh %181 : vector<8x32xf32>
    %183 = vector.extract_strided_slice %178 {offsets = [0, 32], sizes = [8, 32], strides = [1, 1]} : vector<8x128xf32> to vector<8x32xf32>
    %184 = arith.mulf %183, %144 : vector<8x32xf32>
    %185 = arith.mulf %179, %182 : vector<8x32xf32>
    %186 = arith.addf %184, %185 : vector<8x32xf32>
    %187 = math.tanh %186 : vector<8x32xf32>
    %188 = arith.mulf %180, %187 : vector<8x32xf32>
    %189 = arith.truncf %188 : vector<8x32xf32> to vector<8x32xbf16>
    %190 = vector.extract_strided_slice %72 {offsets = [24, 0], sizes = [8, 128], strides = [1, 1]} : vector<64x128xf32> to vector<8x128xf32>
    %c0_96 = arith.constant 0 : index
    %c0_97 = arith.constant 0 : index
    %191 = vector.load %arg3[%c0_96, %c0_97] : memref<32x128xbf16, #tpu.memory_space<vmem>>, vector<32x128xbf16>
    %cst_98 = arith.constant dense<0.000000e+00> : vector<8x128xf32>
    %192 = tpu.matmul %167, %191, %cst_98 {dimension_numbers = #tpu.dot_dimension_numbers<[1], [0], [0], [1], [0, 0, 1, 1], [], []>} : vector<8x32xbf16>, vector<32x128xbf16>, vector<8x128xf32> -> vector<8x128xf32>
    %193 = arith.addf %190, %192 : vector<8x128xf32>
    %194 = arith.negf %193 : vector<8x128xf32>
    %195 = math.exp %194 : vector<8x128xf32>
    %cst_99 = arith.constant 1.000000e+00 : f32
    %196 = vector.broadcast %cst_99 : f32 to vector<8x128xf32>
    %197 = arith.addf %196, %195 : vector<8x128xf32>
    %198 = arith.divf %196, %197 : vector<8x128xf32>
    %199 = vector.extract_strided_slice %198 {offsets = [0, 0], sizes = [8, 32], strides = [1, 1]} : vector<8x128xf32> to vector<8x32xf32>
    %200 = vector.extract_strided_slice %198 {offsets = [0, 96], sizes = [8, 32], strides = [1, 1]} : vector<8x128xf32> to vector<8x32xf32>
    %201 = vector.extract_strided_slice %193 {offsets = [0, 64], sizes = [8, 32], strides = [1, 1]} : vector<8x128xf32> to vector<8x32xf32>
    %202 = math.tanh %201 : vector<8x32xf32>
    %203 = vector.extract_strided_slice %198 {offsets = [0, 32], sizes = [8, 32], strides = [1, 1]} : vector<8x128xf32> to vector<8x32xf32>
    %204 = arith.mulf %203, %164 : vector<8x32xf32>
    %205 = arith.mulf %199, %202 : vector<8x32xf32>
    %206 = arith.addf %204, %205 : vector<8x32xf32>
    %207 = math.tanh %206 : vector<8x32xf32>
    %208 = arith.mulf %200, %207 : vector<8x32xf32>
    %209 = arith.truncf %208 : vector<8x32xf32> to vector<8x32xbf16>
    %c0_100 = arith.constant 0 : index
    %c0_101 = arith.constant 0 : index
    %210 = vector.load %arg5[%c0_100, %c0_101] : memref<32x128xbf16, #tpu.memory_space<vmem>>, vector<32x128xbf16>
    %cst_102 = arith.constant dense<0.000000e+00> : vector<8x128xf32>
    %211 = tpu.matmul %209, %210, %cst_102 {dimension_numbers = #tpu.dot_dimension_numbers<[1], [0], [0], [1], [0, 0, 1, 1], [], []>} : vector<8x32xbf16>, vector<32x128xbf16>, vector<8x128xf32> -> vector<8x128xf32>
    %c0_103 = arith.constant 0 : index
    %c0_104 = arith.constant 0 : index
    %212 = vector.load %arg6[%c0_103, %c0_104] : memref<32x128xbf16, #tpu.memory_space<vmem>>, vector<32x128xbf16>
    %cst_105 = arith.constant dense<0.000000e+00> : vector<8x128xf32>
    %213 = tpu.matmul %189, %212, %cst_105 {dimension_numbers = #tpu.dot_dimension_numbers<[1], [0], [0], [1], [0, 0, 1, 1], [], []>} : vector<8x32xbf16>, vector<32x128xbf16>, vector<8x128xf32> -> vector<8x128xf32>
    %214 = arith.addf %211, %213 : vector<8x128xf32>
    %215 = arith.addf %214, %75 : vector<8x128xf32>
    %216 = arith.negf %215 : vector<8x128xf32>
    %217 = math.exp %216 : vector<8x128xf32>
    %cst_106 = arith.constant 1.000000e+00 : f32
    %218 = vector.broadcast %cst_106 : f32 to vector<8x128xf32>
    %219 = arith.addf %218, %217 : vector<8x128xf32>
    %220 = arith.divf %218, %219 : vector<8x128xf32>
    %221 = vector.extract_strided_slice %220 {offsets = [0, 0], sizes = [8, 32], strides = [1, 1]} : vector<8x128xf32> to vector<8x32xf32>
    %222 = vector.extract_strided_slice %220 {offsets = [0, 96], sizes = [8, 32], strides = [1, 1]} : vector<8x128xf32> to vector<8x32xf32>
    %223 = vector.extract_strided_slice %215 {offsets = [0, 64], sizes = [8, 32], strides = [1, 1]} : vector<8x128xf32> to vector<8x32xf32>
    %224 = math.tanh %223 : vector<8x32xf32>
    %225 = vector.extract_strided_slice %220 {offsets = [0, 32], sizes = [8, 32], strides = [1, 1]} : vector<8x128xf32> to vector<8x32xf32>
    %226 = arith.mulf %225, %186 : vector<8x32xf32>
    %227 = arith.mulf %221, %224 : vector<8x32xf32>
    %228 = arith.addf %226, %227 : vector<8x32xf32>
    %229 = math.tanh %228 : vector<8x32xf32>
    %230 = arith.mulf %222, %229 : vector<8x32xf32>
    %231 = arith.truncf %230 : vector<8x32xf32> to vector<8x32xbf16>
    %232 = vector.extract_strided_slice %72 {offsets = [32, 0], sizes = [8, 128], strides = [1, 1]} : vector<64x128xf32> to vector<8x128xf32>
    %c0_107 = arith.constant 0 : index
    %c0_108 = arith.constant 0 : index
    %233 = vector.load %arg3[%c0_107, %c0_108] : memref<32x128xbf16, #tpu.memory_space<vmem>>, vector<32x128xbf16>
    %cst_109 = arith.constant dense<0.000000e+00> : vector<8x128xf32>
    %234 = tpu.matmul %209, %233, %cst_109 {dimension_numbers = #tpu.dot_dimension_numbers<[1], [0], [0], [1], [0, 0, 1, 1], [], []>} : vector<8x32xbf16>, vector<32x128xbf16>, vector<8x128xf32> -> vector<8x128xf32>
    %235 = arith.addf %232, %234 : vector<8x128xf32>
    %236 = arith.negf %235 : vector<8x128xf32>
    %237 = math.exp %236 : vector<8x128xf32>
    %cst_110 = arith.constant 1.000000e+00 : f32
    %238 = vector.broadcast %cst_110 : f32 to vector<8x128xf32>
    %239 = arith.addf %238, %237 : vector<8x128xf32>
    %240 = arith.divf %238, %239 : vector<8x128xf32>
    %241 = vector.extract_strided_slice %240 {offsets = [0, 0], sizes = [8, 32], strides = [1, 1]} : vector<8x128xf32> to vector<8x32xf32>
    %242 = vector.extract_strided_slice %240 {offsets = [0, 96], sizes = [8, 32], strides = [1, 1]} : vector<8x128xf32> to vector<8x32xf32>
    %243 = vector.extract_strided_slice %235 {offsets = [0, 64], sizes = [8, 32], strides = [1, 1]} : vector<8x128xf32> to vector<8x32xf32>
    %244 = math.tanh %243 : vector<8x32xf32>
    %245 = vector.extract_strided_slice %240 {offsets = [0, 32], sizes = [8, 32], strides = [1, 1]} : vector<8x128xf32> to vector<8x32xf32>
    %246 = arith.mulf %245, %206 : vector<8x32xf32>
    %247 = arith.mulf %241, %244 : vector<8x32xf32>
    %248 = arith.addf %246, %247 : vector<8x32xf32>
    %249 = math.tanh %248 : vector<8x32xf32>
    %250 = arith.mulf %242, %249 : vector<8x32xf32>
    %251 = arith.truncf %250 : vector<8x32xf32> to vector<8x32xbf16>
    %c0_111 = arith.constant 0 : index
    %c0_112 = arith.constant 0 : index
    %252 = vector.load %arg5[%c0_111, %c0_112] : memref<32x128xbf16, #tpu.memory_space<vmem>>, vector<32x128xbf16>
    %cst_113 = arith.constant dense<0.000000e+00> : vector<8x128xf32>
    %253 = tpu.matmul %251, %252, %cst_113 {dimension_numbers = #tpu.dot_dimension_numbers<[1], [0], [0], [1], [0, 0, 1, 1], [], []>} : vector<8x32xbf16>, vector<32x128xbf16>, vector<8x128xf32> -> vector<8x128xf32>
    %c0_114 = arith.constant 0 : index
    %c0_115 = arith.constant 0 : index
    %254 = vector.load %arg6[%c0_114, %c0_115] : memref<32x128xbf16, #tpu.memory_space<vmem>>, vector<32x128xbf16>
    %cst_116 = arith.constant dense<0.000000e+00> : vector<8x128xf32>
    %255 = tpu.matmul %231, %254, %cst_116 {dimension_numbers = #tpu.dot_dimension_numbers<[1], [0], [0], [1], [0, 0, 1, 1], [], []>} : vector<8x32xbf16>, vector<32x128xbf16>, vector<8x128xf32> -> vector<8x128xf32>
    %256 = arith.addf %253, %255 : vector<8x128xf32>
    %257 = arith.addf %256, %75 : vector<8x128xf32>
    %258 = arith.negf %257 : vector<8x128xf32>
    %259 = math.exp %258 : vector<8x128xf32>
    %cst_117 = arith.constant 1.000000e+00 : f32
    %260 = vector.broadcast %cst_117 : f32 to vector<8x128xf32>
    %261 = arith.addf %260, %259 : vector<8x128xf32>
    %262 = arith.divf %260, %261 : vector<8x128xf32>
    %263 = vector.extract_strided_slice %262 {offsets = [0, 0], sizes = [8, 32], strides = [1, 1]} : vector<8x128xf32> to vector<8x32xf32>
    %264 = vector.extract_strided_slice %262 {offsets = [0, 96], sizes = [8, 32], strides = [1, 1]} : vector<8x128xf32> to vector<8x32xf32>
    %265 = vector.extract_strided_slice %257 {offsets = [0, 64], sizes = [8, 32], strides = [1, 1]} : vector<8x128xf32> to vector<8x32xf32>
    %266 = math.tanh %265 : vector<8x32xf32>
    %267 = vector.extract_strided_slice %262 {offsets = [0, 32], sizes = [8, 32], strides = [1, 1]} : vector<8x128xf32> to vector<8x32xf32>
    %268 = arith.mulf %267, %228 : vector<8x32xf32>
    %269 = arith.mulf %263, %266 : vector<8x32xf32>
    %270 = arith.addf %268, %269 : vector<8x32xf32>
    %271 = math.tanh %270 : vector<8x32xf32>
    %272 = arith.mulf %264, %271 : vector<8x32xf32>
    %273 = arith.truncf %272 : vector<8x32xf32> to vector<8x32xbf16>
    %274 = vector.extract_strided_slice %72 {offsets = [40, 0], sizes = [8, 128], strides = [1, 1]} : vector<64x128xf32> to vector<8x128xf32>
    %c0_118 = arith.constant 0 : index
    %c0_119 = arith.constant 0 : index
    %275 = vector.load %arg3[%c0_118, %c0_119] : memref<32x128xbf16, #tpu.memory_space<vmem>>, vector<32x128xbf16>
    %cst_120 = arith.constant dense<0.000000e+00> : vector<8x128xf32>
    %276 = tpu.matmul %251, %275, %cst_120 {dimension_numbers = #tpu.dot_dimension_numbers<[1], [0], [0], [1], [0, 0, 1, 1], [], []>} : vector<8x32xbf16>, vector<32x128xbf16>, vector<8x128xf32> -> vector<8x128xf32>
    %277 = arith.addf %274, %276 : vector<8x128xf32>
    %278 = arith.negf %277 : vector<8x128xf32>
    %279 = math.exp %278 : vector<8x128xf32>
    %cst_121 = arith.constant 1.000000e+00 : f32
    %280 = vector.broadcast %cst_121 : f32 to vector<8x128xf32>
    %281 = arith.addf %280, %279 : vector<8x128xf32>
    %282 = arith.divf %280, %281 : vector<8x128xf32>
    %283 = vector.extract_strided_slice %282 {offsets = [0, 0], sizes = [8, 32], strides = [1, 1]} : vector<8x128xf32> to vector<8x32xf32>
    %284 = vector.extract_strided_slice %282 {offsets = [0, 96], sizes = [8, 32], strides = [1, 1]} : vector<8x128xf32> to vector<8x32xf32>
    %285 = vector.extract_strided_slice %277 {offsets = [0, 64], sizes = [8, 32], strides = [1, 1]} : vector<8x128xf32> to vector<8x32xf32>
    %286 = math.tanh %285 : vector<8x32xf32>
    %287 = vector.extract_strided_slice %282 {offsets = [0, 32], sizes = [8, 32], strides = [1, 1]} : vector<8x128xf32> to vector<8x32xf32>
    %288 = arith.mulf %287, %248 : vector<8x32xf32>
    %289 = arith.mulf %283, %286 : vector<8x32xf32>
    %290 = arith.addf %288, %289 : vector<8x32xf32>
    %291 = math.tanh %290 : vector<8x32xf32>
    %292 = arith.mulf %284, %291 : vector<8x32xf32>
    %293 = arith.truncf %292 : vector<8x32xf32> to vector<8x32xbf16>
    %c0_122 = arith.constant 0 : index
    %c0_123 = arith.constant 0 : index
    %294 = vector.load %arg5[%c0_122, %c0_123] : memref<32x128xbf16, #tpu.memory_space<vmem>>, vector<32x128xbf16>
    %cst_124 = arith.constant dense<0.000000e+00> : vector<8x128xf32>
    %295 = tpu.matmul %293, %294, %cst_124 {dimension_numbers = #tpu.dot_dimension_numbers<[1], [0], [0], [1], [0, 0, 1, 1], [], []>} : vector<8x32xbf16>, vector<32x128xbf16>, vector<8x128xf32> -> vector<8x128xf32>
    %c0_125 = arith.constant 0 : index
    %c0_126 = arith.constant 0 : index
    %296 = vector.load %arg6[%c0_125, %c0_126] : memref<32x128xbf16, #tpu.memory_space<vmem>>, vector<32x128xbf16>
    %cst_127 = arith.constant dense<0.000000e+00> : vector<8x128xf32>
    %297 = tpu.matmul %273, %296, %cst_127 {dimension_numbers = #tpu.dot_dimension_numbers<[1], [0], [0], [1], [0, 0, 1, 1], [], []>} : vector<8x32xbf16>, vector<32x128xbf16>, vector<8x128xf32> -> vector<8x128xf32>
    %298 = arith.addf %295, %297 : vector<8x128xf32>
    %299 = arith.addf %298, %75 : vector<8x128xf32>
    %300 = arith.negf %299 : vector<8x128xf32>
    %301 = math.exp %300 : vector<8x128xf32>
    %cst_128 = arith.constant 1.000000e+00 : f32
    %302 = vector.broadcast %cst_128 : f32 to vector<8x128xf32>
    %303 = arith.addf %302, %301 : vector<8x128xf32>
    %304 = arith.divf %302, %303 : vector<8x128xf32>
    %305 = vector.extract_strided_slice %304 {offsets = [0, 0], sizes = [8, 32], strides = [1, 1]} : vector<8x128xf32> to vector<8x32xf32>
    %306 = vector.extract_strided_slice %304 {offsets = [0, 96], sizes = [8, 32], strides = [1, 1]} : vector<8x128xf32> to vector<8x32xf32>
    %307 = vector.extract_strided_slice %299 {offsets = [0, 64], sizes = [8, 32], strides = [1, 1]} : vector<8x128xf32> to vector<8x32xf32>
    %308 = math.tanh %307 : vector<8x32xf32>
    %309 = vector.extract_strided_slice %304 {offsets = [0, 32], sizes = [8, 32], strides = [1, 1]} : vector<8x128xf32> to vector<8x32xf32>
    %310 = arith.mulf %309, %270 : vector<8x32xf32>
    %311 = arith.mulf %305, %308 : vector<8x32xf32>
    %312 = arith.addf %310, %311 : vector<8x32xf32>
    %313 = math.tanh %312 : vector<8x32xf32>
    %314 = arith.mulf %306, %313 : vector<8x32xf32>
    %315 = arith.truncf %314 : vector<8x32xf32> to vector<8x32xbf16>
    %316 = vector.extract_strided_slice %72 {offsets = [48, 0], sizes = [8, 128], strides = [1, 1]} : vector<64x128xf32> to vector<8x128xf32>
    %c0_129 = arith.constant 0 : index
    %c0_130 = arith.constant 0 : index
    %317 = vector.load %arg3[%c0_129, %c0_130] : memref<32x128xbf16, #tpu.memory_space<vmem>>, vector<32x128xbf16>
    %cst_131 = arith.constant dense<0.000000e+00> : vector<8x128xf32>
    %318 = tpu.matmul %293, %317, %cst_131 {dimension_numbers = #tpu.dot_dimension_numbers<[1], [0], [0], [1], [0, 0, 1, 1], [], []>} : vector<8x32xbf16>, vector<32x128xbf16>, vector<8x128xf32> -> vector<8x128xf32>
    %319 = arith.addf %316, %318 : vector<8x128xf32>
    %320 = arith.negf %319 : vector<8x128xf32>
    %321 = math.exp %320 : vector<8x128xf32>
    %cst_132 = arith.constant 1.000000e+00 : f32
    %322 = vector.broadcast %cst_132 : f32 to vector<8x128xf32>
    %323 = arith.addf %322, %321 : vector<8x128xf32>
    %324 = arith.divf %322, %323 : vector<8x128xf32>
    %325 = vector.extract_strided_slice %324 {offsets = [0, 0], sizes = [8, 32], strides = [1, 1]} : vector<8x128xf32> to vector<8x32xf32>
    %326 = vector.extract_strided_slice %324 {offsets = [0, 96], sizes = [8, 32], strides = [1, 1]} : vector<8x128xf32> to vector<8x32xf32>
    %327 = vector.extract_strided_slice %319 {offsets = [0, 64], sizes = [8, 32], strides = [1, 1]} : vector<8x128xf32> to vector<8x32xf32>
    %328 = math.tanh %327 : vector<8x32xf32>
    %329 = vector.extract_strided_slice %324 {offsets = [0, 32], sizes = [8, 32], strides = [1, 1]} : vector<8x128xf32> to vector<8x32xf32>
    %330 = arith.mulf %329, %290 : vector<8x32xf32>
    %331 = arith.mulf %325, %328 : vector<8x32xf32>
    %332 = arith.addf %330, %331 : vector<8x32xf32>
    %333 = math.tanh %332 : vector<8x32xf32>
    %334 = arith.mulf %326, %333 : vector<8x32xf32>
    %335 = arith.truncf %334 : vector<8x32xf32> to vector<8x32xbf16>
    %c0_133 = arith.constant 0 : index
    %c0_134 = arith.constant 0 : index
    %336 = vector.load %arg5[%c0_133, %c0_134] : memref<32x128xbf16, #tpu.memory_space<vmem>>, vector<32x128xbf16>
    %cst_135 = arith.constant dense<0.000000e+00> : vector<8x128xf32>
    %337 = tpu.matmul %335, %336, %cst_135 {dimension_numbers = #tpu.dot_dimension_numbers<[1], [0], [0], [1], [0, 0, 1, 1], [], []>} : vector<8x32xbf16>, vector<32x128xbf16>, vector<8x128xf32> -> vector<8x128xf32>
    %c0_136 = arith.constant 0 : index
    %c0_137 = arith.constant 0 : index
    %338 = vector.load %arg6[%c0_136, %c0_137] : memref<32x128xbf16, #tpu.memory_space<vmem>>, vector<32x128xbf16>
    %cst_138 = arith.constant dense<0.000000e+00> : vector<8x128xf32>
    %339 = tpu.matmul %315, %338, %cst_138 {dimension_numbers = #tpu.dot_dimension_numbers<[1], [0], [0], [1], [0, 0, 1, 1], [], []>} : vector<8x32xbf16>, vector<32x128xbf16>, vector<8x128xf32> -> vector<8x128xf32>
    %340 = arith.addf %337, %339 : vector<8x128xf32>
    %341 = arith.addf %340, %75 : vector<8x128xf32>
    %342 = arith.negf %341 : vector<8x128xf32>
    %343 = math.exp %342 : vector<8x128xf32>
    %cst_139 = arith.constant 1.000000e+00 : f32
    %344 = vector.broadcast %cst_139 : f32 to vector<8x128xf32>
    %345 = arith.addf %344, %343 : vector<8x128xf32>
    %346 = arith.divf %344, %345 : vector<8x128xf32>
    %347 = vector.extract_strided_slice %346 {offsets = [0, 0], sizes = [8, 32], strides = [1, 1]} : vector<8x128xf32> to vector<8x32xf32>
    %348 = vector.extract_strided_slice %346 {offsets = [0, 96], sizes = [8, 32], strides = [1, 1]} : vector<8x128xf32> to vector<8x32xf32>
    %349 = vector.extract_strided_slice %341 {offsets = [0, 64], sizes = [8, 32], strides = [1, 1]} : vector<8x128xf32> to vector<8x32xf32>
    %350 = math.tanh %349 : vector<8x32xf32>
    %351 = vector.extract_strided_slice %346 {offsets = [0, 32], sizes = [8, 32], strides = [1, 1]} : vector<8x128xf32> to vector<8x32xf32>
    %352 = arith.mulf %351, %312 : vector<8x32xf32>
    %353 = arith.mulf %347, %350 : vector<8x32xf32>
    %354 = arith.addf %352, %353 : vector<8x32xf32>
    %355 = math.tanh %354 : vector<8x32xf32>
    %356 = arith.mulf %348, %355 : vector<8x32xf32>
    %357 = arith.truncf %356 : vector<8x32xf32> to vector<8x32xbf16>
    %358 = vector.extract_strided_slice %72 {offsets = [56, 0], sizes = [8, 128], strides = [1, 1]} : vector<64x128xf32> to vector<8x128xf32>
    %c0_140 = arith.constant 0 : index
    %c0_141 = arith.constant 0 : index
    %359 = vector.load %arg3[%c0_140, %c0_141] : memref<32x128xbf16, #tpu.memory_space<vmem>>, vector<32x128xbf16>
    %cst_142 = arith.constant dense<0.000000e+00> : vector<8x128xf32>
    %360 = tpu.matmul %335, %359, %cst_142 {dimension_numbers = #tpu.dot_dimension_numbers<[1], [0], [0], [1], [0, 0, 1, 1], [], []>} : vector<8x32xbf16>, vector<32x128xbf16>, vector<8x128xf32> -> vector<8x128xf32>
    %361 = arith.addf %358, %360 : vector<8x128xf32>
    %362 = arith.negf %361 : vector<8x128xf32>
    %363 = math.exp %362 : vector<8x128xf32>
    %cst_143 = arith.constant 1.000000e+00 : f32
    %364 = vector.broadcast %cst_143 : f32 to vector<8x128xf32>
    %365 = arith.addf %364, %363 : vector<8x128xf32>
    %366 = arith.divf %364, %365 : vector<8x128xf32>
    %367 = vector.extract_strided_slice %366 {offsets = [0, 0], sizes = [8, 32], strides = [1, 1]} : vector<8x128xf32> to vector<8x32xf32>
    %368 = vector.extract_strided_slice %366 {offsets = [0, 96], sizes = [8, 32], strides = [1, 1]} : vector<8x128xf32> to vector<8x32xf32>
    %369 = vector.extract_strided_slice %361 {offsets = [0, 64], sizes = [8, 32], strides = [1, 1]} : vector<8x128xf32> to vector<8x32xf32>
    %370 = math.tanh %369 : vector<8x32xf32>
    %371 = vector.extract_strided_slice %366 {offsets = [0, 32], sizes = [8, 32], strides = [1, 1]} : vector<8x128xf32> to vector<8x32xf32>
    %372 = arith.mulf %371, %332 : vector<8x32xf32>
    %373 = arith.mulf %367, %370 : vector<8x32xf32>
    %374 = arith.addf %372, %373 : vector<8x32xf32>
    %375 = math.tanh %374 : vector<8x32xf32>
    %376 = arith.mulf %368, %375 : vector<8x32xf32>
    %377 = arith.truncf %376 : vector<8x32xf32> to vector<8x32xbf16>
    %c0_144 = arith.constant 0 : index
    %c0_145 = arith.constant 0 : index
    %378 = vector.load %arg5[%c0_144, %c0_145] : memref<32x128xbf16, #tpu.memory_space<vmem>>, vector<32x128xbf16>
    %cst_146 = arith.constant dense<0.000000e+00> : vector<8x128xf32>
    %379 = tpu.matmul %377, %378, %cst_146 {dimension_numbers = #tpu.dot_dimension_numbers<[1], [0], [0], [1], [0, 0, 1, 1], [], []>} : vector<8x32xbf16>, vector<32x128xbf16>, vector<8x128xf32> -> vector<8x128xf32>
    %c0_147 = arith.constant 0 : index
    %c0_148 = arith.constant 0 : index
    %380 = vector.load %arg6[%c0_147, %c0_148] : memref<32x128xbf16, #tpu.memory_space<vmem>>, vector<32x128xbf16>
    %cst_149 = arith.constant dense<0.000000e+00> : vector<8x128xf32>
    %381 = tpu.matmul %357, %380, %cst_149 {dimension_numbers = #tpu.dot_dimension_numbers<[1], [0], [0], [1], [0, 0, 1, 1], [], []>} : vector<8x32xbf16>, vector<32x128xbf16>, vector<8x128xf32> -> vector<8x128xf32>
    %382 = arith.addf %379, %381 : vector<8x128xf32>
    %383 = arith.addf %382, %75 : vector<8x128xf32>
    %384 = arith.negf %383 : vector<8x128xf32>
    %385 = math.exp %384 : vector<8x128xf32>
    %cst_150 = arith.constant 1.000000e+00 : f32
    %386 = vector.broadcast %cst_150 : f32 to vector<8x128xf32>
    %387 = arith.addf %386, %385 : vector<8x128xf32>
    %388 = arith.divf %386, %387 : vector<8x128xf32>
    %389 = vector.extract_strided_slice %388 {offsets = [0, 0], sizes = [8, 32], strides = [1, 1]} : vector<8x128xf32> to vector<8x32xf32>
    %390 = vector.extract_strided_slice %388 {offsets = [0, 96], sizes = [8, 32], strides = [1, 1]} : vector<8x128xf32> to vector<8x32xf32>
    %391 = vector.extract_strided_slice %383 {offsets = [0, 64], sizes = [8, 32], strides = [1, 1]} : vector<8x128xf32> to vector<8x32xf32>
    %392 = math.tanh %391 : vector<8x32xf32>
    %393 = vector.extract_strided_slice %388 {offsets = [0, 32], sizes = [8, 32], strides = [1, 1]} : vector<8x128xf32> to vector<8x32xf32>
    %394 = arith.mulf %393, %354 : vector<8x32xf32>
    %395 = arith.mulf %389, %392 : vector<8x32xf32>
    %396 = arith.addf %394, %395 : vector<8x32xf32>
    %397 = math.tanh %396 : vector<8x32xf32>
    %398 = arith.mulf %390, %397 : vector<8x32xf32>
    %399 = arith.truncf %398 : vector<8x32xf32> to vector<8x32xbf16>
    %c0_151 = arith.constant 0 : index
    %c0_152 = arith.constant 0 : index
    %400 = vector.load %arg8[%c0_151, %c0_152] : memref<32x32xbf16, #tpu.memory_space<vmem>>, vector<32x32xbf16>
    %cst_153 = arith.constant dense<0.000000e+00> : vector<8x32xf32>
    %401 = tpu.matmul %399, %400, %cst_153 {dimension_numbers = #tpu.dot_dimension_numbers<[1], [0], [0], [1], [0, 0, 1, 1], [], []>} : vector<8x32xbf16>, vector<32x32xbf16>, vector<8x32xf32> -> vector<8x32xf32>
    %c0_154 = arith.constant 0 : index
    %c0_155 = arith.constant 0 : index
    %402 = vector.load %arg9[%c0_154, %c0_155] : memref<1x32xf32, #tpu.memory_space<vmem>>, vector<1x32xf32>
    %403 = vector.broadcast %402 : vector<1x32xf32> to vector<8x32xf32>
    %404 = arith.addf %401, %403 : vector<8x32xf32>
    %cst_156 = arith.constant 0.000000e+00 : f32
    %405 = vector.broadcast %cst_156 : f32 to vector<8x32xf32>
    %406 = arith.maximumf %404, %405 : vector<8x32xf32>
    %c0_157 = arith.constant 0 : index
    %c0_158 = arith.constant 0 : index
    %407 = vector.load %arg10[%c0_157, %c0_158] : memref<1x32xf32, #tpu.memory_space<vmem>>, vector<1x32xf32>
    %408 = vector.broadcast %407 : vector<1x32xf32> to vector<8x32xf32>
    %409 = arith.mulf %406, %408 : vector<8x32xf32>
    %cst_159 = arith.constant dense<0.000000e+00> : vector<8xf32>
    %410 = vector.multi_reduction <add>, %409, %cst_159 [1] : vector<8x32xf32> to vector<8xf32>
    %411 = vector.shape_cast %410 : vector<8xf32> to vector<8x1xf32>
    %c0_160 = arith.constant 0 : index
    %c0_161 = arith.constant 0 : index
    %412 = vector.load %arg11[%c0_160, %c0_161] : memref<1x1xf32, #tpu.memory_space<vmem>>, vector<1x1xf32>
    %413 = vector.broadcast %412 : vector<1x1xf32> to vector<8x1xf32>
    %414 = arith.addf %411, %413 : vector<8x1xf32>
    %415 = vector.extract_strided_slice %414 {offsets = [0, 0], sizes = [2, 1], strides = [1, 1]} : vector<8x1xf32> to vector<2x1xf32>
    %c0_162 = arith.constant 0 : index
    %c0_163 = arith.constant 0 : index
    %416 = vector.load %arg12[%c0_162, %c0_163] : memref<2x1xf32, #tpu.memory_space<vmem>>, vector<2x1xf32>
    tpu.vector_store %arg12[%c0_162, %c0_163], %415 {strides = array<i32>} : memref<2x1xf32, #tpu.memory_space<vmem>>, vector<2x1xf32>,
    return
  }
}

</mosaic_0001>

<llo_original>
// kernel: lstm_torch_nn_forward.1
$region0: #{lstm_torch_nn_forward.1}
  #allocation0 [shape = 'u32[]', space=smem, size = 0x4, offset = 0x4, fixed_abs, tag = 'smem constant byte address 0x4 - core index']
  #allocation1 [shape = 'u32[144,128]{1,0:T(1,128)}', space=vmem, size = 0x12000, scoped, tag = 'internal scratch']
  #allocation2 [shape = 'f32[64,32]{1,0:T(8,128)}', space=vmem, size = 0x8000, scoped, tag = 'scratch operand']
  #allocation3 [shape = 'f32[1,1]{1,0:T(1,128)S(1)}', space=vmem, size = 0x200, scoped, tag = 'scoped memory for lstm_torch_nn_forward.1']
  %s0 = inlined_call_operand.vmem [shape: s32[2,8], index: 0, kind: input, shape index: {}]
  %s1 = inlined_call_operand.vmem [shape: f32[100,32], index: 1, kind: input, shape index: {}]
  %s2 = inlined_call_operand.vmem [shape: bf16[32,128], index: 2, kind: input, shape index: {}]
  %s3 = inlined_call_operand.vmem [shape: bf16[32,128], index: 3, kind: input, shape index: {}]
  %s4 = inlined_call_operand.vmem [shape: f32[1,128], index: 4, kind: input, shape index: {}]
  %s5 = inlined_call_operand.vmem [shape: bf16[32,128], index: 5, kind: input, shape index: {}]
  %s6 = inlined_call_operand.vmem [shape: bf16[32,128], index: 6, kind: input, shape index: {}]
  %s7 = inlined_call_operand.vmem [shape: f32[1,128], index: 7, kind: input, shape index: {}]
  %s8 = inlined_call_operand.vmem [shape: bf16[32,32], index: 8, kind: input, shape index: {}]
  %s9 = inlined_call_operand.vmem [shape: f32[1,32], index: 9, kind: input, shape index: {}]
  %s10 = inlined_call_operand.vmem [shape: f32[1,32], index: 10, kind: input, shape index: {}]
  %s11 = inlined_call_operand.<no memory space> [shape: f32[1,1], index: 11, kind: input, shape index: {}]
  %s12 = inlined_call_operand.vmem [shape: f32[2,1], index: 12, kind: output, shape index: {}]
  %s13 = sld [smem:[#allocation0]]
  $region62: #{lstm_torch_nn_forward.1} parent=0
    _
  %s15 = ssub.s32 1, %s13
  %s16 = scalar_select 0, %s15, %s13
  %v17 = vstv %s11
  %18 = vst [vmem:[#allocation3] sm:$0x1] %v17
  $region1: #{lstm_torch_nn_forward.1} parent=0
    #allocation4 [shape = 'u8[1024]{0}', space=smem, size = 0x400, scoped, tag = 'input window, operand 0, single buffered']
    #allocation5 [shape = 's32[1]{0}', space=sflag, size = 0x4, scoped, tag = 'scoped memory for lstm_torch_nn_forward.1']
    %19 = vsyncpa [#allocation5], 0
    // Predicated region
    $region2: #{lstm_torch_nn_forward.1} parent=1 // pred_check
      _
    $region3: #{lstm_torch_nn_forward.1} parent=1 // pred_check_branch
      %21 = sbr.rel (0) target = $region5
    $region4: #{lstm_torch_nn_forward.1} parent=1 // pred_region
      %s23 = ssub.s32 32, 32
      %24 = vsyncadd [#allocation5], %s23
      %s26 = sshll.u32 %s0, 4
      %s27 = int_to_ptr.vmem [resolvable:$true] %s26
      %29 = dma.vmem_to_smem %s27, 32, [#allocation4], [#allocation5]
    $region5: #{lstm_torch_nn_forward.1} parent=1 // pred_fallthru
      _
    // Predicated region
    $region6: #{lstm_torch_nn_forward.1} parent=1 // pred_check
      _
    $region7: #{lstm_torch_nn_forward.1} parent=1 // pred_check_branch
      %31 = sbr.rel (0) target = $region9
    $region8: #{lstm_torch_nn_forward.1} parent=1 // pred_region
      _
    $region9: #{lstm_torch_nn_forward.1} parent=1 // pred_fallthru
      _
    // Predicated region
    $region10: #{lstm_torch_nn_forward.1} parent=1 // pred_check
      _
    $region11: #{lstm_torch_nn_forward.1} parent=1 // pred_check_branch
      %33 = sbr.rel (0) target = $region13
    $region12: #{lstm_torch_nn_forward.1} parent=1 // pred_region
      _
    $region13: #{lstm_torch_nn_forward.1} parent=1 // pred_fallthru
      _
    // Predicated region
    $region14: #{lstm_torch_nn_forward.1} parent=1 // pred_check
      _
    $region15: #{lstm_torch_nn_forward.1} parent=1 // pred_check_branch
      %35 = sbr.rel (0) target = $region17
    $region16: #{lstm_torch_nn_forward.1} parent=1 // pred_region
      _
    $region17: #{lstm_torch_nn_forward.1} parent=1 // pred_fallthru
      _
    // Predicated region
    $region18: #{lstm_torch_nn_forward.1} parent=1 // pred_check
      _
    $region19: #{lstm_torch_nn_forward.1} parent=1 // pred_check_branch
      %37 = sbr.rel (0) target = $region21
    $region20: #{lstm_torch_nn_forward.1} parent=1 // pred_region
      _
    $region21: #{lstm_torch_nn_forward.1} parent=1 // pred_fallthru
      _
    // Predicated region
    $region22: #{lstm_torch_nn_forward.1} parent=1 // pred_check
      _
    $region23: #{lstm_torch_nn_forward.1} parent=1 // pred_check_branch
      %39 = sbr.rel (0) target = $region25
    $region24: #{lstm_torch_nn_forward.1} parent=1 // pred_region
      _
    $region25: #{lstm_torch_nn_forward.1} parent=1 // pred_fallthru
      _
    // Predicated region
    $region26: #{lstm_torch_nn_forward.1} parent=1 // pred_check
      _
    $region27: #{lstm_torch_nn_forward.1} parent=1 // pred_check_branch
      %41 = sbr.rel (0) target = $region29
    $region28: #{lstm_torch_nn_forward.1} parent=1 // pred_region
      _
    $region29: #{lstm_torch_nn_forward.1} parent=1 // pred_fallthru
      _
    // Predicated region
    $region30: #{lstm_torch_nn_forward.1} parent=1 // pred_check
      _
    $region31: #{lstm_torch_nn_forward.1} parent=1 // pred_check_branch
      %43 = sbr.rel (0) target = $region33
    $region32: #{lstm_torch_nn_forward.1} parent=1 // pred_region
      _
    $region33: #{lstm_torch_nn_forward.1} parent=1 // pred_fallthru
      _
    // Predicated region
    $region34: #{lstm_torch_nn_forward.1} parent=1 // pred_check
      _
    $region35: #{lstm_torch_nn_forward.1} parent=1 // pred_check_branch
      %45 = sbr.rel (0) target = $region37
    $region36: #{lstm_torch_nn_forward.1} parent=1 // pred_region
      _
    $region37: #{lstm_torch_nn_forward.1} parent=1 // pred_fallthru
      _
    // Predicated region
    $region38: #{lstm_torch_nn_forward.1} parent=1 // pred_check
      _
    $region39: #{lstm_torch_nn_forward.1} parent=1 // pred_check_branch
      %47 = sbr.rel (0) target = $region41
    $region40: #{lstm_torch_nn_forward.1} parent=1 // pred_region
      _
    $region41: #{lstm_torch_nn_forward.1} parent=1 // pred_fallthru
      _
    // Predicated region
    $region42: #{lstm_torch_nn_forward.1} parent=1 // pred_check
      _
    $region43: #{lstm_torch_nn_forward.1} parent=1 // pred_check_branch
      %49 = sbr.rel (0) target = $region45
    $region44: #{lstm_torch_nn_forward.1} parent=1 // pred_region
      _
    $region45: #{lstm_torch_nn_forward.1} parent=1 // pred_fallthru
      _
    // Predicated region
    $region46: #{lstm_torch_nn_forward.1} parent=1 // pred_check
      _
    $region47: #{lstm_torch_nn_forward.1} parent=1 // pred_check_branch
      %51 = sbr.rel (0) target = $region49
    $region48: #{lstm_torch_nn_forward.1} parent=1 // pred_region
      _
    $region49: #{lstm_torch_nn_forward.1} parent=1 // pred_fallthru
      _
    // Predicated region
    $region50: #{lstm_torch_nn_forward.1} parent=1 // pred_check
      _
    $region51: #{lstm_torch_nn_forward.1} parent=1 // pred_check_branch
      %53 = sbr.rel (0) target = $region53
    $region52: #{lstm_torch_nn_forward.1} parent=1 // pred_region
      %54 = dma.done [#allocation5], 32
    $region53: #{lstm_torch_nn_forward.1} parent=1 // pred_fallthru
      _
    %55 = sfence
    %vm57 = vcmask 261120
    %58 = vst.msk [vmem:[#allocation2] sm:$0xff] %vm57, 0.0
    %59 = vst.msk [vmem:[#allocation2 + $0x8] sm:$0xff] %vm57, 0.0
    %60 = vst.msk [vmem:[#allocation2 + $0x10] sm:$0xff] %vm57, 0.0
    %61 = vst.msk [vmem:[#allocation2 + $0x18] sm:$0xff] %vm57, 0.0
    %62 = vst.msk [vmem:[#allocation2 + $0x20] sm:$0xff] %vm57, 0.0
    %63 = vst.msk [vmem:[#allocation2 + $0x28] sm:$0xff] %vm57, 0.0
    %64 = vst.msk [vmem:[#allocation2 + $0x30] sm:$0xff] %vm57, 0.0
    %65 = vst.msk [vmem:[#allocation2 + $0x38] sm:$0xff] %vm57, 0.0
    %s66 = sld [smem:[#allocation4]]
    %s67 = scalar_lea.vmem %s1, %s66
    %v68 = vld [vmem:[%s67] sm:$0x1]
    %vm69 = vcmask 253952
    %70 = vst.msk [vmem:[#allocation2] sm:$0x1] %vm69, %v68
    %s71 = sld [smem:[#allocation4 + $0x80]]
    %s72 = scalar_lea.vmem %s1, %s71
    %v73 = vld [vmem:[%s72] sm:$0x1]
    %74 = vst.msk [vmem:[#allocation2 + $0x1] sm:$0x1] %vm69, %v73
    %s75 = sld [smem:[#allocation4 + $0x1]]
    %s76 = scalar_lea.vmem %s1, %s75
    %v77 = vld [vmem:[%s76] sm:$0x1]
    %78 = vst.msk [vmem:[#allocation2 + $0x8] sm:$0x1] %vm69, %v77
    %s79 = sld [smem:[#allocation4 + $0x81]]
    %s80 = scalar_lea.vmem %s1, %s79
    %v81 = vld [vmem:[%s80] sm:$0x1]
    %82 = vst.msk [vmem:[#allocation2 + $0x9] sm:$0x1] %vm69, %v81
    %s83 = sld [smem:[#allocation4 + $0x2]]
    %s84 = scalar_lea.vmem %s1, %s83
    %v85 = vld [vmem:[%s84] sm:$0x1]
    %86 = vst.msk [vmem:[#allocation2 + $0x10] sm:$0x1] %vm69, %v85
    %s87 = sld [smem:[#allocation4 + $0x82]]
    %s88 = scalar_lea.vmem %s1, %s87
    %v89 = vld [vmem:[%s88] sm:$0x1]
    %90 = vst.msk [vmem:[#allocation2 + $0x11] sm:$0x1] %vm69, %v89
    %s91 = sld [smem:[#allocation4 + $0x3]]
    %s92 = scalar_lea.vmem %s1, %s91
    %v93 = vld [vmem:[%s92] sm:$0x1]
    %94 = vst.msk [vmem:[#allocation2 + $0x18] sm:$0x1] %vm69, %v93
    %s95 = sld [smem:[#allocation4 + $0x83]]
    %s96 = scalar_lea.vmem %s1, %s95
    %v97 = vld [vmem:[%s96] sm:$0x1]
    %98 = vst.msk [vmem:[#allocation2 + $0x19] sm:$0x1] %vm69, %v97
    %s99 = sld [smem:[#allocation4 + $0x4]]
    %s100 = scalar_lea.vmem %s1, %s99
    %v101 = vld [vmem:[%s100] sm:$0x1]
    %102 = vst.msk [vmem:[#allocation2 + $0x20] sm:$0x1] %vm69, %v101
    %s103 = sld [smem:[#allocation4 + $0x84]]
    %s104 = scalar_lea.vmem %s1, %s103
    %v105 = vld [vmem:[%s104] sm:$0x1]
    %106 = vst.msk [vmem:[#allocation2 + $0x21] sm:$0x1] %vm69, %v105
    %s107 = sld [smem:[#allocation4 + $0x5]]
    %s108 = scalar_lea.vmem %s1, %s107
    %v109 = vld [vmem:[%s108] sm:$0x1]
    %110 = vst.msk [vmem:[#allocation2 + $0x28] sm:$0x1] %vm69, %v109
    %s111 = sld [smem:[#allocation4 + $0x85]]
    %s112 = scalar_lea.vmem %s1, %s111
    %v113 = vld [vmem:[%s112] sm:$0x1]
    %114 = vst.msk [vmem:[#allocation2 + $0x29] sm:$0x1] %vm69, %v113
    %s115 = sld [smem:[#allocation4 + $0x6]]
    %s116 = scalar_lea.vmem %s1, %s115
    %v117 = vld [vmem:[%s116] sm:$0x1]
    %118 = vst.msk [vmem:[#allocation2 + $0x30] sm:$0x1] %vm69, %v117
    %s119 = sld [smem:[#allocation4 + $0x86]]
    %s120 = scalar_lea.vmem %s1, %s119
    %v121 = vld [vmem:[%s120] sm:$0x1]
    %122 = vst.msk [vmem:[#allocation2 + $0x31] sm:$0x1] %vm69, %v121
    %s123 = sld [smem:[#allocation4 + $0x7]]
    %s124 = scalar_lea.vmem %s1, %s123
    %v125 = vld [vmem:[%s124] sm:$0x1]
    %126 = vst.msk [vmem:[#allocation2 + $0x38] sm:$0x1] %vm69, %v125
    %s127 = sld [smem:[#allocation4 + $0x87]]
    %s128 = scalar_lea.vmem %s1, %s127
    %v129 = vld [vmem:[%s128] sm:$0x1]
    %130 = vst.msk [vmem:[#allocation2 + $0x39] sm:$0x1] %vm69, %v129
    %v131 = vld [vmem:[#allocation2] sm:$0xff]
    %v132 = vld [vmem:[#allocation2 + $0x8] sm:$0xff]
    %v133 = vld [vmem:[#allocation2 + $0x10] sm:$0xff]
    %v134 = vld [vmem:[#allocation2 + $0x18] sm:$0xff]
    %v135 = vld [vmem:[#allocation2 + $0x20] sm:$0xff]
    %v136 = vld [vmem:[#allocation2 + $0x28] sm:$0xff]
    %v137 = vld [vmem:[#allocation2 + $0x30] sm:$0xff]
    %v138 = vld [vmem:[#allocation2 + $0x38] sm:$0xff]
    %v139 = vpack.c.bf16 %v132, %v131
    %v140 = vpack.c.bf16 %v134, %v133
    %v141 = vpack.c.bf16 %v136, %v135
    %v142 = vpack.c.bf16 %v138, %v137
    %v143 = vld [vmem:[%s2] sm:$0xf]
    %v144 = vld [vmem:[%s2 + $0x4] sm:$0xf]
    %v145 = vld [vmem:[%s2 + $0x8] sm:$0xf]
    %v146 = vld [vmem:[%s2 + $0xc] sm:$0xf]
    %v147 = vld [vmem:[%s4] sm:$0x1]
    %v149 = vlaneseq
    %v150 = vshrl.u32 %v149, 7
    %v151 = vsub.s32 0, %v150
    %v152 = vrot.slane %v147, %v151
    %v158 = vunpack.c.l.b16 %v143
    %v159 = vunpack.c.l.b16 %v144
    %v160 = vunpack.c.l.b16 %v145
    %v161 = vunpack.c.l.b16 %v146
    %v162 = vpack.c.b16 %v159, %v158
    %v163 = vpack.c.b16 %v161, %v160
    %v167 = vsel %vm57, %v139, 0
    %v170 = vsel %vm57, %v140, 0
    %v173 = vsel %vm57, %v141, 0
    %v176 = vsel %vm57, %v142, 0
    %178 = vmatprep.subr.bf16.mxu0 0
    %179 = vmatpush1.bf16.msra.mxu0 %v162
    %180 = vmatprep.subr.bf16.mxu0 0
    %181 = vmatpush1.bf16.msra.mxu0 %v163
    %182 = vmatprep.subr.bf16.mxu0 0
    %183 = vmatpush1.bf16.msra.mxu0 0
    %184 = vmatprep.subr.bf16.mxu0 0
    %185 = vmatpush1.bf16.msra.mxu0 0
    %186 = vmatprep.subr.bf16.mxu0 0
    %187 = vmatpush1.bf16.msra.mxu0 0
    %188 = vmatprep.subr.bf16.mxu0 0
    %189 = vmatpush1.bf16.msra.mxu0 0
    %190 = vmatprep.subr.bf16.mxu0 0
    %191 = vmatpush1.bf16.msra.mxu0 0
    %192 = vmatprep.subr.bf16.mxu0 0
    %193 = vmatpush1.bf16.msra.mxu0 0
    %194 = vmatprep.subr.bf16.mxu0 0
    %195 = vmatpush1.bf16.msra.mxu0 0
    %196 = vmatprep.subr.bf16.mxu0 0
    %197 = vmatpush1.bf16.msra.mxu0 0
    %198 = vmatprep.subr.bf16.mxu0 0
    %199 = vmatpush1.bf16.msra.mxu0 0
    %200 = vmatprep.subr.bf16.mxu0 0
    %201 = vmatpush1.bf16.msra.mxu0 0
    %202 = vmatprep.subr.bf16.mxu0 0
    %203 = vmatpush1.bf16.msra.mxu0 0
    %204 = vmatprep.subr.bf16.mxu0 0
    %205 = vmatpush1.bf16.msra.mxu0 0
    %206 = vmatprep.subr.bf16.mxu0 0
    %207 = vmatpush1.bf16.msra.mxu0 0
    %208 = vmatprep.subr.bf16.mxu0 0
    %209 = vmatpush1.bf16.msra.mxu0 0
    %210 = vmatprep.mubr.bf16.mxu0 0
    %211 = vmatmul.mubr.bf16.gmra.mrb[0].mxu0 %v167
    %v212 = vpop.f32.mrb[0].mxu0
    %v213 = vadd.f32 %v152, %v212
    %v214 = vpop.f32.mrb[0].mxu0
    %v215 = vpop.f32.mrb[0].mxu0
    %v216 = vadd.f32 %v152, %v215
    %v217 = vpop.f32.mrb[0].mxu0
    %218 = vmatprep.mubr.bf16.mxu0 0
    %219 = vmatmul.mubr.bf16.gmra.mrb[0].mxu0 %v170
    %v220 = vpop.f32.mrb[0].mxu0
    %v221 = vadd.f32 %v152, %v220
    %v222 = vpop.f32.mrb[0].mxu0
    %v223 = vpop.f32.mrb[0].mxu0
    %v224 = vadd.f32 %v152, %v223
    %v225 = vpop.f32.mrb[0].mxu0
    %226 = vmatprep.mubr.bf16.mxu0 0
    %227 = vmatmul.mubr.bf16.gmra.mrb[0].mxu0 %v173
    %v228 = vpop.f32.mrb[0].mxu0
    %v229 = vadd.f32 %v152, %v228
    %v230 = vpop.f32.mrb[0].mxu0
    %v231 = vpop.f32.mrb[0].mxu0
    %v232 = vadd.f32 %v152, %v231
    %v233 = vpop.f32.mrb[0].mxu0
    %234 = vmatprep.mubr.bf16.mxu0 0
    %235 = vmatmul.mubr.bf16.gmra.mrb[0].mxu0 %v176
    %v236 = vpop.f32.mrb[0].mxu0
    %v237 = vadd.f32 %v152, %v236
    %v238 = vpop.f32.mrb[0].mxu0
    %v239 = vpop.f32.mrb[0].mxu0
    %v240 = vadd.f32 %v152, %v239
    %v241 = vpop.f32.mrb[0].mxu0
    %242 = vdwg.mxu0
    %v243 = vld [vmem:[%s7] sm:$0x1]
    %v245 = vlaneseq
    %v246 = vshrl.u32 %v245, 7
    %v247 = vsub.s32 0, %v246
    %v248 = vrot.slane %v243, %v247
    %v250 = vxor.u32 %v213, 2147483648
    %v251 = vmul.f32 %v250, 1.442695
    %v252 = vpow.pop %v251
    %v253 = vadd.f32 %v252, 1.0
    %v254 = vrcp.pop %v253
    %v255 = vmul.f32 1.0, %v254
    %v256 = vtanh.pop %v213
    %258 = vrot.lane.b32.xlu0 %v256, 64
    %v259 = vpop.permute.xlu0 %258
    %v261 = vmul.f32 %v255, %v259
    %v262 = vtanh.pop %v261
    %264 = vrot.lane.b32.xlu0 %v262, 96
    %v265 = vpop.permute.xlu0 %264
    %v267 = vmul.f32 %v255, %v265
    %v268 = vpack.c.bf16 %v267, %v267
    %v269 = vld [vmem:[%s5] sm:$0xf]
    %v270 = vld [vmem:[%s5 + $0x4] sm:$0xf]
    %v271 = vld [vmem:[%s5 + $0x8] sm:$0xf]
    %v272 = vld [vmem:[%s5 + $0xc] sm:$0xf]
    %274 = vrot.lane.b32.xlu0 %v268, 32
    %v275 = vpop.permute.xlu0 %274
    %v280 = vunpack.c.l.b16 %v269
    %v281 = vunpack.c.l.b16 %v270
    %v282 = vunpack.c.l.b16 %v271
    %v283 = vunpack.c.l.b16 %v272
    %v284 = vpack.c.b16 %v281, %v280
    %v285 = vpack.c.b16 %v283, %v282
    %v289 = vsel %vm57, %v275, 0
    %291 = vmatprep.subr.bf16.mxu0 0
    %292 = vmatpush1.bf16.msra.mxu0 %v284
    %293 = vmatprep.subr.bf16.mxu0 0
    %294 = vmatpush1.bf16.msra.mxu0 %v285
    %295 = vmatprep.subr.bf16.mxu0 0
    %296 = vmatpush1.bf16.msra.mxu0 0
    %297 = vmatprep.subr.bf16.mxu0 0
    %298 = vmatpush1.bf16.msra.mxu0 0
    %299 = vmatprep.subr.bf16.mxu0 0
    %300 = vmatpush1.bf16.msra.mxu0 0
    %301 = vmatprep.subr.bf16.mxu0 0
    %302 = vmatpush1.bf16.msra.mxu0 0
    %303 = vmatprep.subr.bf16.mxu0 0
    %304 = vmatpush1.bf16.msra.mxu0 0
    %305 = vmatprep.subr.bf16.mxu0 0
    %306 = vmatpush1.bf16.msra.mxu0 0
    %307 = vmatprep.subr.bf16.mxu0 0
    %308 = vmatpush1.bf16.msra.mxu0 0
    %309 = vmatprep.subr.bf16.mxu0 0
    %310 = vmatpush1.bf16.msra.mxu0 0
    %311 = vmatprep.subr.bf16.mxu0 0
    %312 = vmatpush1.bf16.msra.mxu0 0
    %313 = vmatprep.subr.bf16.mxu0 0
    %314 = vmatpush1.bf16.msra.mxu0 0
    %315 = vmatprep.subr.bf16.mxu0 0
    %316 = vmatpush1.bf16.msra.mxu0 0
    %317 = vmatprep.subr.bf16.mxu0 0
    %318 = vmatpush1.bf16.msra.mxu0 0
    %319 = vmatprep.subr.bf16.mxu0 0
    %320 = vmatpush1.bf16.msra.mxu0 0
    %321 = vmatprep.subr.bf16.mxu0 0
    %322 = vmatpush1.bf16.msra.mxu0 0
    %323 = vmatprep.mubr.bf16.mxu0 0
    %324 = vmatmul.mubr.bf16.gmra.mrb[0].mxu0 %v289
    %v325 = vpop.f32.mrb[0].mxu0
    %v326 = vadd.f32 %v248, %v325
    %v327 = vpop.f32.mrb[0].mxu0
    %v328 = vpop.f32.mrb[0].mxu0
    %v329 = vpop.f32.mrb[0].mxu0
    %330 = vdwg.mxu0
    %v331 = vxor.u32 %v326, 2147483648
    %v332 = vmul.f32 %v331, 1.442695
    %v333 = vpow.pop %v332
    %v334 = vadd.f32 %v333, 1.0
    %v335 = vrcp.pop %v334
    %v336 = vmul.f32 1.0, %v335
    %v337 = vtanh.pop %v326
    %339 = vrot.lane.b32.xlu0 %v337, 64
    %v340 = vpop.permute.xlu0 %339
    %v342 = vmul.f32 %v336, %v340
    %v343 = vtanh.pop %v342
    %345 = vrot.lane.b32.xlu0 %v343, 96
    %v346 = vpop.permute.xlu0 %345
    %v348 = vmul.f32 %v336, %v346
    %v349 = vpack.c.bf16 %v348, %v348
    %v350 = vld [vmem:[%s3] sm:$0xf]
    %v351 = vld [vmem:[%s3 + $0x4] sm:$0xf]
    %v352 = vld [vmem:[%s3 + $0x8] sm:$0xf]
    %v353 = vld [vmem:[%s3 + $0xc] sm:$0xf]
    %v358 = vunpack.c.l.b16 %v350
    %v359 = vunpack.c.l.b16 %v351
    %v360 = vunpack.c.l.b16 %v352
    %v361 = vunpack.c.l.b16 %v353
    %v362 = vpack.c.b16 %v359, %v358
    %v363 = vpack.c.b16 %v361, %v360
    %366 = vmatprep.subr.bf16.mxu0 0
    %367 = vmatpush1.bf16.msra.mxu0 %v362
    %368 = vmatprep.subr.bf16.mxu0 0
    %369 = vmatpush1.bf16.msra.mxu0 %v363
    %370 = vmatprep.subr.bf16.mxu0 0
    %371 = vmatpush1.bf16.msra.mxu0 0
    %372 = vmatprep.subr.bf16.mxu0 0
    %373 = vmatpush1.bf16.msra.mxu0 0
    %374 = vmatprep.subr.bf16.mxu0 0
    %375 = vmatpush1.bf16.msra.mxu0 0
    %376 = vmatprep.subr.bf16.mxu0 0
    %377 = vmatpush1.bf16.msra.mxu0 0
    %378 = vmatprep.subr.bf16.mxu0 0
    %379 = vmatpush1.bf16.msra.mxu0 0
    %380 = vmatprep.subr.bf16.mxu0 0
    %381 = vmatpush1.bf16.msra.mxu0 0
    %382 = vmatprep.subr.bf16.mxu0 0
    %383 = vmatpush1.bf16.msra.mxu0 0
    %384 = vmatprep.subr.bf16.mxu0 0
    %385 = vmatpush1.bf16.msra.mxu0 0
    %386 = vmatprep.subr.bf16.mxu0 0
    %387 = vmatpush1.bf16.msra.mxu0 0
    %388 = vmatprep.subr.bf16.mxu0 0
    %389 = vmatpush1.bf16.msra.mxu0 0
    %390 = vmatprep.subr.bf16.mxu0 0
    %391 = vmatpush1.bf16.msra.mxu0 0
    %392 = vmatprep.subr.bf16.mxu0 0
    %393 = vmatpush1.bf16.msra.mxu0 0
    %394 = vmatprep.subr.bf16.mxu0 0
    %395 = vmatpush1.bf16.msra.mxu0 0
    %396 = vmatprep.subr.bf16.mxu0 0
    %397 = vmatpush1.bf16.msra.mxu0 0
    %398 = vmatprep.mubr.bf16.mxu0 0
    %399 = vmatmul.mubr.bf16.gmra.mrb[0].mxu0 %v289
    %v400 = vpop.f32.mrb[0].mxu0
    %v401 = vadd.f32 0.0, %v400
    %v402 = vpop.f32.mrb[0].mxu0
    %v403 = vpop.f32.mrb[0].mxu0
    %v404 = vpop.f32.mrb[0].mxu0
    %405 = vdwg.mxu0
    %v406 = vadd.f32 %v216, %v401
    %v407 = vxor.u32 %v406, 2147483648
    %v408 = vmul.f32 %v407, 1.442695
    %v409 = vpow.pop %v408
    %v410 = vadd.f32 %v409, 1.0
    %v411 = vrcp.pop %v410
    %v412 = vmul.f32 1.0, %v411
    %v413 = vtanh.pop %v406
    %415 = vrot.lane.b32.xlu0 %v261, 32
    %v416 = vpop.permute.xlu0 %415
    %v418 = vmul.f32 %v412, %v416
    %420 = vrot.lane.b32.xlu0 %v413, 64
    %v421 = vpop.permute.xlu0 %420
    %v423 = vmul.f32 %v412, %v421
    %425 = vrot.lane.b32.xlu0 %v423, 32
    %v426 = vpop.permute.xlu0 %425
    %v428 = vadd.f32 %v418, %v426
    %v429 = vtanh.pop %v428
    %431 = vrot.lane.b32.xlu0 %v429, 64
    %v432 = vpop.permute.xlu0 %431
    %v434 = vmul.f32 %v412, %v432
    %v435 = vpack.c.bf16 %v434, %v434
    %v436 = vld [vmem:[%s6] sm:$0xf]
    %v437 = vld [vmem:[%s6 + $0x4] sm:$0xf]
    %v438 = vld [vmem:[%s6 + $0x8] sm:$0xf]
    %v439 = vld [vmem:[%s6 + $0xc] sm:$0xf]
    %441 = vrot.lane.b32.xlu0 %v349, 32
    %v442 = vpop.permute.xlu0 %441
    %v447 = vunpack.c.l.b16 %v436
    %v448 = vunpack.c.l.b16 %v437
    %v449 = vunpack.c.l.b16 %v438
    %v450 = vunpack.c.l.b16 %v439
    %v451 = vpack.c.b16 %v448, %v447
    %v452 = vpack.c.b16 %v450, %v449
    %v456 = vsel %vm57, %v442, 0
    %458 = vmatprep.subr.bf16.mxu0 0
    %459 = vmatpush1.bf16.msra.mxu0 %v451
    %460 = vmatprep.subr.bf16.mxu0 0
    %461 = vmatpush1.bf16.msra.mxu0 %v452
    %462 = vmatprep.subr.bf16.mxu0 0
    %463 = vmatpush1.bf16.msra.mxu0 0
    %464 = vmatprep.subr.bf16.mxu0 0
    %465 = vmatpush1.bf16.msra.mxu0 0
    %466 = vmatprep.subr.bf16.mxu0 0
    %467 = vmatpush1.bf16.msra.mxu0 0
    %468 = vmatprep.subr.bf16.mxu0 0
    %469 = vmatpush1.bf16.msra.mxu0 0
    %470 = vmatprep.subr.bf16.mxu0 0
    %471 = vmatpush1.bf16.msra.mxu0 0
    %472 = vmatprep.subr.bf16.mxu0 0
    %473 = vmatpush1.bf16.msra.mxu0 0
    %474 = vmatprep.subr.bf16.mxu0 0
    %475 = vmatpush1.bf16.msra.mxu0 0
    %476 = vmatprep.subr.bf16.mxu0 0
    %477 = vmatpush1.bf16.msra.mxu0 0
    %478 = vmatprep.subr.bf16.mxu0 0
    %479 = vmatpush1.bf16.msra.mxu0 0
    %480 = vmatprep.subr.bf16.mxu0 0
    %481 = vmatpush1.bf16.msra.mxu0 0
    %482 = vmatprep.subr.bf16.mxu0 0
    %483 = vmatpush1.bf16.msra.mxu0 0
    %484 = vmatprep.subr.bf16.mxu0 0
    %485 = vmatpush1.bf16.msra.mxu0 0
    %486 = vmatprep.subr.bf16.mxu0 0
    %487 = vmatpush1.bf16.msra.mxu0 0
    %488 = vmatprep.subr.bf16.mxu0 0
    %489 = vmatpush1.bf16.msra.mxu0 0
    %490 = vmatprep.mubr.bf16.mxu0 0
    %491 = vmatmul.mubr.bf16.gmra.mrb[0].mxu0 %v456
    %v492 = vpop.f32.mrb[0].mxu0
    %v493 = vadd.f32 0.0, %v492
    %v494 = vpop.f32.mrb[0].mxu0
    %v495 = vpop.f32.mrb[0].mxu0
    %v496 = vpop.f32.mrb[0].mxu0
    %497 = vdwg.mxu0
    %499 = vrot.lane.b32.xlu0 %v435, 32
    %v500 = vpop.permute.xlu0 %499
    %v502 = vsel %vm57, %v500, 0
    %504 = vmatprep.subr.bf16.mxu0 0
    %505 = vmatpush1.bf16.msra.mxu0 %v284
    %506 = vmatprep.subr.bf16.mxu0 0
    %507 = vmatpush1.bf16.msra.mxu0 %v285
    %508 = vmatprep.subr.bf16.mxu0 0
    %509 = vmatpush1.bf16.msra.mxu0 0
    %510 = vmatprep.subr.bf16.mxu0 0
    %511 = vmatpush1.bf16.msra.mxu0 0
    %512 = vmatprep.subr.bf16.mxu0 0
    %513 = vmatpush1.bf16.msra.mxu0 0
    %514 = vmatprep.subr.bf16.mxu0 0
    %515 = vmatpush1.bf16.msra.mxu0 0
    %516 = vmatprep.subr.bf16.mxu0 0
    %517 = vmatpush1.bf16.msra.mxu0 0
    %518 = vmatprep.subr.bf16.mxu0 0
    %519 = vmatpush1.bf16.msra.mxu0 0
    %520 = vmatprep.subr.bf16.mxu0 0
    %521 = vmatpush1.bf16.msra.mxu0 0
    %522 = vmatprep.subr.bf16.mxu0 0
    %523 = vmatpush1.bf16.msra.mxu0 0
    %524 = vmatprep.subr.bf16.mxu0 0
    %525 = vmatpush1.bf16.msra.mxu0 0
    %526 = vmatprep.subr.bf16.mxu0 0
    %527 = vmatpush1.bf16.msra.mxu0 0
    %528 = vmatprep.subr.bf16.mxu0 0
    %529 = vmatpush1.bf16.msra.mxu0 0
    %530 = vmatprep.subr.bf16.mxu0 0
    %531 = vmatpush1.bf16.msra.mxu0 0
    %532 = vmatprep.subr.bf16.mxu0 0
    %533 = vmatpush1.bf16.msra.mxu0 0
    %534 = vmatprep.subr.bf16.mxu0 0
    %535 = vmatpush1.bf16.msra.mxu0 0
    %536 = vmatprep.mubr.bf16.mxu0 0
    %537 = vmatmul.mubr.bf16.gmra.mrb[0].mxu0 %v502
    %v538 = vpop.f32.mrb[0].mxu0
    %v539 = vadd.f32 %v493, %v538
    %v540 = vpop.f32.mrb[0].mxu0
    %v541 = vpop.f32.mrb[0].mxu0
    %v542 = vpop.f32.mrb[0].mxu0
    %543 = vdwg.mxu0
    %v544 = vadd.f32 %v539, %v248
    %v545 = vxor.u32 %v544, 2147483648
    %v546 = vmul.f32 %v545, 1.442695
    %v547 = vpow.pop %v546
    %v548 = vadd.f32 %v547, 1.0
    %v549 = vrcp.pop %v548
    %v550 = vmul.f32 1.0, %v549
    %v551 = vtanh.pop %v544
    %553 = vrot.lane.b32.xlu0 %v342, 32
    %v554 = vpop.permute.xlu0 %553
    %v556 = vmul.f32 %v550, %v554
    %558 = vrot.lane.b32.xlu0 %v551, 64
    %v559 = vpop.permute.xlu0 %558
    %v561 = vmul.f32 %v550, %v559
    %563 = vrot.lane.b32.xlu0 %v561, 32
    %v564 = vpop.permute.xlu0 %563
    %v566 = vadd.f32 %v556, %v564
    %v567 = vtanh.pop %v566
    %569 = vrot.lane.b32.xlu0 %v567, 64
    %v570 = vpop.permute.xlu0 %569
    %v572 = vmul.f32 %v550, %v570
    %v573 = vpack.c.bf16 %v572, %v572
    %574 = vmatprep.subr.bf16.mxu0 0
    %575 = vmatpush1.bf16.msra.mxu0 %v362
    %576 = vmatprep.subr.bf16.mxu0 0
    %577 = vmatpush1.bf16.msra.mxu0 %v363
    %578 = vmatprep.subr.bf16.mxu0 0
    %579 = vmatpush1.bf16.msra.mxu0 0
    %580 = vmatprep.subr.bf16.mxu0 0
    %581 = vmatpush1.bf16.msra.mxu0 0
    %582 = vmatprep.subr.bf16.mxu0 0
    %583 = vmatpush1.bf16.msra.mxu0 0
    %584 = vmatprep.subr.bf16.mxu0 0
    %585 = vmatpush1.bf16.msra.mxu0 0
    %586 = vmatprep.subr.bf16.mxu0 0
    %587 = vmatpush1.bf16.msra.mxu0 0
    %588 = vmatprep.subr.bf16.mxu0 0
    %589 = vmatpush1.bf16.msra.mxu0 0
    %590 = vmatprep.subr.bf16.mxu0 0
    %591 = vmatpush1.bf16.msra.mxu0 0
    %592 = vmatprep.subr.bf16.mxu0 0
    %593 = vmatpush1.bf16.msra.mxu0 0
    %594 = vmatprep.subr.bf16.mxu0 0
    %595 = vmatpush1.bf16.msra.mxu0 0
    %596 = vmatprep.subr.bf16.mxu0 0
    %597 = vmatpush1.bf16.msra.mxu0 0
    %598 = vmatprep.subr.bf16.mxu0 0
    %599 = vmatpush1.bf16.msra.mxu0 0
    %600 = vmatprep.subr.bf16.mxu0 0
    %601 = vmatpush1.bf16.msra.mxu0 0
    %602 = vmatprep.subr.bf16.mxu0 0
    %603 = vmatpush1.bf16.msra.mxu0 0
    %604 = vmatprep.subr.bf16.mxu0 0
    %605 = vmatpush1.bf16.msra.mxu0 0
    %606 = vmatprep.mubr.bf16.mxu0 0
    %607 = vmatmul.mubr.bf16.gmra.mrb[0].mxu0 %v502
    %v608 = vpop.f32.mrb[0].mxu0
    %v609 = vadd.f32 0.0, %v608
    %v610 = vpop.f32.mrb[0].mxu0
    %v611 = vpop.f32.mrb[0].mxu0
    %v612 = vpop.f32.mrb[0].mxu0
    %613 = vdwg.mxu0
    %v614 = vadd.f32 %v221, %v609
    %v615 = vxor.u32 %v614, 2147483648
    %v616 = vmul.f32 %v615, 1.442695
    %v617 = vpow.pop %v616
    %v618 = vadd.f32 %v617, 1.0
    %v619 = vrcp.pop %v618
    %v620 = vmul.f32 1.0, %v619
    %v621 = vtanh.pop %v614
    %v622 = vmul.f32 %v620, %v428
    %624 = vrot.lane.b32.xlu0 %v621, 64
    %v625 = vpop.permute.xlu0 %624
    %v627 = vmul.f32 %v620, %v625
    %629 = vrot.lane.b32.xlu0 %v627, 32
    %v630 = vpop.permute.xlu0 %629
    %v632 = vadd.f32 %v622, %v630
    %v633 = vtanh.pop %v632
    %635 = vrot.lane.b32.xlu0 %v633, 64
    %v636 = vpop.permute.xlu0 %635
    %v638 = vmul.f32 %v620, %v636
    %v639 = vpack.c.bf16 %v638, %v638
    %641 = vrot.lane.b32.xlu0 %v573, 32
    %v642 = vpop.permute.xlu0 %641
    %v644 = vsel %vm57, %v642, 0
    %646 = vmatprep.subr.bf16.mxu0 0
    %647 = vmatpush1.bf16.msra.mxu0 %v451
    %648 = vmatprep.subr.bf16.mxu0 0
    %649 = vmatpush1.bf16.msra.mxu0 %v452
    %650 = vmatprep.subr.bf16.mxu0 0
    %651 = vmatpush1.bf16.msra.mxu0 0
    %652 = vmatprep.subr.bf16.mxu0 0
    %653 = vmatpush1.bf16.msra.mxu0 0
    %654 = vmatprep.subr.bf16.mxu0 0
    %655 = vmatpush1.bf16.msra.mxu0 0
    %656 = vmatprep.subr.bf16.mxu0 0
    %657 = vmatpush1.bf16.msra.mxu0 0
    %658 = vmatprep.subr.bf16.mxu0 0
    %659 = vmatpush1.bf16.msra.mxu0 0
    %660 = vmatprep.subr.bf16.mxu0 0
    %661 = vmatpush1.bf16.msra.mxu0 0
    %662 = vmatprep.subr.bf16.mxu0 0
    %663 = vmatpush1.bf16.msra.mxu0 0
    %664 = vmatprep.subr.bf16.mxu0 0
    %665 = vmatpush1.bf16.msra.mxu0 0
    %666 = vmatprep.subr.bf16.mxu0 0
    %667 = vmatpush1.bf16.msra.mxu0 0
    %668 = vmatprep.subr.bf16.mxu0 0
    %669 = vmatpush1.bf16.msra.mxu0 0
    %670 = vmatprep.subr.bf16.mxu0 0
    %671 = vmatpush1.bf16.msra.mxu0 0
    %672 = vmatprep.subr.bf16.mxu0 0
    %673 = vmatpush1.bf16.msra.mxu0 0
    %674 = vmatprep.subr.bf16.mxu0 0
    %675 = vmatpush1.bf16.msra.mxu0 0
    %676 = vmatprep.subr.bf16.mxu0 0
    %677 = vmatpush1.bf16.msra.mxu0 0
    %678 = vmatprep.mubr.bf16.mxu0 0
    %679 = vmatmul.mubr.bf16.gmra.mrb[0].mxu0 %v644
    %v680 = vpop.f32.mrb[0].mxu0
    %v681 = vadd.f32 0.0, %v680
    %v682 = vpop.f32.mrb[0].mxu0
    %v683 = vpop.f32.mrb[0].mxu0
    %v684 = vpop.f32.mrb[0].mxu0
    %685 = vdwg.mxu0
    %687 = vrot.lane.b32.xlu0 %v639, 32
    %v688 = vpop.permute.xlu0 %687
    %v690 = vsel %vm57, %v688, 0
    %692 = vmatprep.subr.bf16.mxu0 0
    %693 = vmatpush1.bf16.msra.mxu0 %v284
    %694 = vmatprep.subr.bf16.mxu0 0
    %695 = vmatpush1.bf16.msra.mxu0 %v285
    %696 = vmatprep.subr.bf16.mxu0 0
    %697 = vmatpush1.bf16.msra.mxu0 0
    %698 = vmatprep.subr.bf16.mxu0 0
    %699 = vmatpush1.bf16.msra.mxu0 0
    %700 = vmatprep.subr.bf16.mxu0 0
    %701 = vmatpush1.bf16.msra.mxu0 0
    %702 = vmatprep.subr.bf16.mxu0 0
    %703 = vmatpush1.bf16.msra.mxu0 0
    %704 = vmatprep.subr.bf16.mxu0 0
    %705 = vmatpush1.bf16.msra.mxu0 0
    %706 = vmatprep.subr.bf16.mxu0 0
    %707 = vmatpush1.bf16.msra.mxu0 0
    %708 = vmatprep.subr.bf16.mxu0 0
    %709 = vmatpush1.bf16.msra.mxu0 0
    %710 = vmatprep.subr.bf16.mxu0 0
    %711 = vmatpush1.bf16.msra.mxu0 0
    %712 = vmatprep.subr.bf16.mxu0 0
    %713 = vmatpush1.bf16.msra.mxu0 0
    %714 = vmatprep.subr.bf16.mxu0 0
    %715 = vmatpush1.bf16.msra.mxu0 0
    %716 = vmatprep.subr.bf16.mxu0 0
    %717 = vmatpush1.bf16.msra.mxu0 0
    %718 = vmatprep.subr.bf16.mxu0 0
    %719 = vmatpush1.bf16.msra.mxu0 0
    %720 = vmatprep.subr.bf16.mxu0 0
    %721 = vmatpush1.bf16.msra.mxu0 0
    %722 = vmatprep.subr.bf16.mxu0 0
    %723 = vmatpush1.bf16.msra.mxu0 0
    %724 = vmatprep.mubr.bf16.mxu0 0
    %725 = vmatmul.mubr.bf16.gmra.mrb[0].mxu0 %v690
    %v726 = vpop.f32.mrb[0].mxu0
    %v727 = vadd.f32 %v681, %v726
    %v728 = vpop.f32.mrb[0].mxu0
    %v729 = vpop.f32.mrb[0].mxu0
    %v730 = vpop.f32.mrb[0].mxu0
    %731 = vdwg.mxu0
    %v732 = vadd.f32 %v727, %v248
    %v733 = vxor.u32 %v732, 2147483648
    %v734 = vmul.f32 %v733, 1.442695
    %v735 = vpow.pop %v734
    %v736 = vadd.f32 %v735, 1.0
    %v737 = vrcp.pop %v736
    %v738 = vmul.f32 1.0, %v737
    %v739 = vtanh.pop %v732
    %v740 = vmul.f32 %v738, %v566
    %742 = vrot.lane.b32.xlu0 %v739, 64
    %v743 = vpop.permute.xlu0 %742
    %v745 = vmul.f32 %v738, %v743
    %747 = vrot.lane.b32.xlu0 %v745, 32
    %v748 = vpop.permute.xlu0 %747
    %v750 = vadd.f32 %v740, %v748
    %v751 = vtanh.pop %v750
    %753 = vrot.lane.b32.xlu0 %v751, 64
    %v754 = vpop.permute.xlu0 %753
    %v756 = vmul.f32 %v738, %v754
    %v757 = vpack.c.bf16 %v756, %v756
    %758 = vmatprep.subr.bf16.mxu0 0
    %759 = vmatpush1.bf16.msra.mxu0 %v362
    %760 = vmatprep.subr.bf16.mxu0 0
    %761 = vmatpush1.bf16.msra.mxu0 %v363
    %762 = vmatprep.subr.bf16.mxu0 0
    %763 = vmatpush1.bf16.msra.mxu0 0
    %764 = vmatprep.subr.bf16.mxu0 0
    %765 = vmatpush1.bf16.msra.mxu0 0
    %766 = vmatprep.subr.bf16.mxu0 0
    %767 = vmatpush1.bf16.msra.mxu0 0
    %768 = vmatprep.subr.bf16.mxu0 0
    %769 = vmatpush1.bf16.msra.mxu0 0
    %770 = vmatprep.subr.bf16.mxu0 0
    %771 = vmatpush1.bf16.msra.mxu0 0
    %772 = vmatprep.subr.bf16.mxu0 0
    %773 = vmatpush1.bf16.msra.mxu0 0
    %774 = vmatprep.subr.bf16.mxu0 0
    %775 = vmatpush1.bf16.msra.mxu0 0
    %776 = vmatprep.subr.bf16.mxu0 0
    %777 = vmatpush1.bf16.msra.mxu0 0
    %778 = vmatprep.subr.bf16.mxu0 0
    %779 = vmatpush1.bf16.msra.mxu0 0
    %780 = vmatprep.subr.bf16.mxu0 0
    %781 = vmatpush1.bf16.msra.mxu0 0
    %782 = vmatprep.subr.bf16.mxu0 0
    %783 = vmatpush1.bf16.msra.mxu0 0
    %784 = vmatprep.subr.bf16.mxu0 0
    %785 = vmatpush1.bf16.msra.mxu0 0
    %786 = vmatprep.subr.bf16.mxu0 0
    %787 = vmatpush1.bf16.msra.mxu0 0
    %788 = vmatprep.subr.bf16.mxu0 0
    %789 = vmatpush1.bf16.msra.mxu0 0
    %790 = vmatprep.mubr.bf16.mxu0 0
    %791 = vmatmul.mubr.bf16.gmra.mrb[0].mxu0 %v690
    %v792 = vpop.f32.mrb[0].mxu0
    %v793 = vadd.f32 0.0, %v792
    %v794 = vpop.f32.mrb[0].mxu0
    %v795 = vpop.f32.mrb[0].mxu0
    %v796 = vpop.f32.mrb[0].mxu0
    %797 = vdwg.mxu0
    %v798 = vadd.f32 %v224, %v793
    %v799 = vxor.u32 %v798, 2147483648
    %v800 = vmul.f32 %v799, 1.442695
    %v801 = vpow.pop %v800
    %v802 = vadd.f32 %v801, 1.0
    %v803 = vrcp.pop %v802
    %v804 = vmul.f32 1.0, %v803
    %v805 = vtanh.pop %v798
    %v806 = vmul.f32 %v804, %v632
    %808 = vrot.lane.b32.xlu0 %v805, 64
    %v809 = vpop.permute.xlu0 %808
    %v811 = vmul.f32 %v804, %v809
    %813 = vrot.lane.b32.xlu0 %v811, 32
    %v814 = vpop.permute.xlu0 %813
    %v816 = vadd.f32 %v806, %v814
    %v817 = vtanh.pop %v816
    %819 = vrot.lane.b32.xlu0 %v817, 64
    %v820 = vpop.permute.xlu0 %819
    %v822 = vmul.f32 %v804, %v820
    %v823 = vpack.c.bf16 %v822, %v822
    %825 = vrot.lane.b32.xlu0 %v757, 32
    %v826 = vpop.permute.xlu0 %825
    %v828 = vsel %vm57, %v826, 0
    %830 = vmatprep.subr.bf16.mxu0 0
    %831 = vmatpush1.bf16.msra.mxu0 %v451
    %832 = vmatprep.subr.bf16.mxu0 0
    %833 = vmatpush1.bf16.msra.mxu0 %v452
    %834 = vmatprep.subr.bf16.mxu0 0
    %835 = vmatpush1.bf16.msra.mxu0 0
    %836 = vmatprep.subr.bf16.mxu0 0
    %837 = vmatpush1.bf16.msra.mxu0 0
    %838 = vmatprep.subr.bf16.mxu0 0
    %839 = vmatpush1.bf16.msra.mxu0 0
    %840 = vmatprep.subr.bf16.mxu0 0
    %841 = vmatpush1.bf16.msra.mxu0 0
    %842 = vmatprep.subr.bf16.mxu0 0
    %843 = vmatpush1.bf16.msra.mxu0 0
    %844 = vmatprep.subr.bf16.mxu0 0
    %845 = vmatpush1.bf16.msra.mxu0 0
    %846 = vmatprep.subr.bf16.mxu0 0
    %847 = vmatpush1.bf16.msra.mxu0 0
    %848 = vmatprep.subr.bf16.mxu0 0
    %849 = vmatpush1.bf16.msra.mxu0 0
    %850 = vmatprep.subr.bf16.mxu0 0
    %851 = vmatpush1.bf16.msra.mxu0 0
    %852 = vmatprep.subr.bf16.mxu0 0
    %853 = vmatpush1.bf16.msra.mxu0 0
    %854 = vmatprep.subr.bf16.mxu0 0
    %855 = vmatpush1.bf16.msra.mxu0 0
    %856 = vmatprep.subr.bf16.mxu0 0
    %857 = vmatpush1.bf16.msra.mxu0 0
    %858 = vmatprep.subr.bf16.mxu0 0
    %859 = vmatpush1.bf16.msra.mxu0 0
    %860 = vmatprep.subr.bf16.mxu0 0
    %861 = vmatpush1.bf16.msra.mxu0 0
    %862 = vmatprep.mubr.bf16.mxu0 0
    %863 = vmatmul.mubr.bf16.gmra.mrb[0].mxu0 %v828
    %v864 = vpop.f32.mrb[0].mxu0
    %v865 = vadd.f32 0.0, %v864
    %v866 = vpop.f32.mrb[0].mxu0
    %v867 = vpop.f32.mrb[0].mxu0
    %v868 = vpop.f32.mrb[0].mxu0
    %869 = vdwg.mxu0
    %871 = vrot.lane.b32.xlu0 %v823, 32
    %v872 = vpop.permute.xlu0 %871
    %v874 = vsel %vm57, %v872, 0
    %876 = vmatprep.subr.bf16.mxu0 0
    %877 = vmatpush1.bf16.msra.mxu0 %v284
    %878 = vmatprep.subr.bf16.mxu0 0
    %879 = vmatpush1.bf16.msra.mxu0 %v285
    %880 = vmatprep.subr.bf16.mxu0 0
    %881 = vmatpush1.bf16.msra.mxu0 0
    %882 = vmatprep.subr.bf16.mxu0 0
    %883 = vmatpush1.bf16.msra.mxu0 0
    %884 = vmatprep.subr.bf16.mxu0 0
    %885 = vmatpush1.bf16.msra.mxu0 0
    %886 = vmatprep.subr.bf16.mxu0 0
    %887 = vmatpush1.bf16.msra.mxu0 0
    %888 = vmatprep.subr.bf16.mxu0 0
    %889 = vmatpush1.bf16.msra.mxu0 0
    %890 = vmatprep.subr.bf16.mxu0 0
    %891 = vmatpush1.bf16.msra.mxu0 0
    %892 = vmatprep.subr.bf16.mxu0 0
    %893 = vmatpush1.bf16.msra.mxu0 0
    %894 = vmatprep.subr.bf16.mxu0 0
    %895 = vmatpush1.bf16.msra.mxu0 0
    %896 = vmatprep.subr.bf16.mxu0 0
    %897 = vmatpush1.bf16.msra.mxu0 0
    %898 = vmatprep.subr.bf16.mxu0 0
    %899 = vmatpush1.bf16.msra.mxu0 0
    %900 = vmatprep.subr.bf16.mxu0 0
    %901 = vmatpush1.bf16.msra.mxu0 0
    %902 = vmatprep.subr.bf16.mxu0 0
    %903 = vmatpush1.bf16.msra.mxu0 0
    %904 = vmatprep.subr.bf16.mxu0 0
    %905 = vmatpush1.bf16.msra.mxu0 0
    %906 = vmatprep.subr.bf16.mxu0 0
    %907 = vmatpush1.bf16.msra.mxu0 0
    %908 = vmatprep.mubr.bf16.mxu0 0
    %909 = vmatmul.mubr.bf16.gmra.mrb[0].mxu0 %v874
    %v910 = vpop.f32.mrb[0].mxu0
    %v911 = vadd.f32 %v865, %v910
    %v912 = vpop.f32.mrb[0].mxu0
    %v913 = vpop.f32.mrb[0].mxu0
    %v914 = vpop.f32.mrb[0].mxu0
    %915 = vdwg.mxu0
    %v916 = vadd.f32 %v911, %v248
    %v917 = vxor.u32 %v916, 2147483648
    %v918 = vmul.f32 %v917, 1.442695
    %v919 = vpow.pop %v918
    %v920 = vadd.f32 %v919, 1.0
    %v921 = vrcp.pop %v920
    %v922 = vmul.f32 1.0, %v921
    %v923 = vtanh.pop %v916
    %v924 = vmul.f32 %v922, %v750
    %926 = vrot.lane.b32.xlu0 %v923, 64
    %v927 = vpop.permute.xlu0 %926
    %v929 = vmul.f32 %v922, %v927
    %931 = vrot.lane.b32.xlu0 %v929, 32
    %v932 = vpop.permute.xlu0 %931
    %v934 = vadd.f32 %v924, %v932
    %v935 = vtanh.pop %v934
    %937 = vrot.lane.b32.xlu0 %v935, 64
    %v938 = vpop.permute.xlu0 %937
    %v940 = vmul.f32 %v922, %v938
    %v941 = vpack.c.bf16 %v940, %v940
    %942 = vmatprep.subr.bf16.mxu0 0
    %943 = vmatpush1.bf16.msra.mxu0 %v362
    %944 = vmatprep.subr.bf16.mxu0 0
    %945 = vmatpush1.bf16.msra.mxu0 %v363
    %946 = vmatprep.subr.bf16.mxu0 0
    %947 = vmatpush1.bf16.msra.mxu0 0
    %948 = vmatprep.subr.bf16.mxu0 0
    %949 = vmatpush1.bf16.msra.mxu0 0
    %950 = vmatprep.subr.bf16.mxu0 0
    %951 = vmatpush1.bf16.msra.mxu0 0
    %952 = vmatprep.subr.bf16.mxu0 0
    %953 = vmatpush1.bf16.msra.mxu0 0
    %954 = vmatprep.subr.bf16.mxu0 0
    %955 = vmatpush1.bf16.msra.mxu0 0
    %956 = vmatprep.subr.bf16.mxu0 0
    %957 = vmatpush1.bf16.msra.mxu0 0
    %958 = vmatprep.subr.bf16.mxu0 0
    %959 = vmatpush1.bf16.msra.mxu0 0
    %960 = vmatprep.subr.bf16.mxu0 0
    %961 = vmatpush1.bf16.msra.mxu0 0
    %962 = vmatprep.subr.bf16.mxu0 0
    %963 = vmatpush1.bf16.msra.mxu0 0
    %964 = vmatprep.subr.bf16.mxu0 0
    %965 = vmatpush1.bf16.msra.mxu0 0
    %966 = vmatprep.subr.bf16.mxu0 0
    %967 = vmatpush1.bf16.msra.mxu0 0
    %968 = vmatprep.subr.bf16.mxu0 0
    %969 = vmatpush1.bf16.msra.mxu0 0
    %970 = vmatprep.subr.bf16.mxu0 0
    %971 = vmatpush1.bf16.msra.mxu0 0
    %972 = vmatprep.subr.bf16.mxu0 0
    %973 = vmatpush1.bf16.msra.mxu0 0
    %974 = vmatprep.mubr.bf16.mxu0 0
    %975 = vmatmul.mubr.bf16.gmra.mrb[0].mxu0 %v874
    %v976 = vpop.f32.mrb[0].mxu0
    %v977 = vadd.f32 0.0, %v976
    %v978 = vpop.f32.mrb[0].mxu0
    %v979 = vpop.f32.mrb[0].mxu0
    %v980 = vpop.f32.mrb[0].mxu0
    %981 = vdwg.mxu0
    %v982 = vadd.f32 %v229, %v977
    %v983 = vxor.u32 %v982, 2147483648
    %v984 = vmul.f32 %v983, 1.442695
    %v985 = vpow.pop %v984
    %v986 = vadd.f32 %v985, 1.0
    %v987 = vrcp.pop %v986
    %v988 = vmul.f32 1.0, %v987
    %v989 = vtanh.pop %v982
    %v990 = vmul.f32 %v988, %v816
    %992 = vrot.lane.b32.xlu0 %v989, 64
    %v993 = vpop.permute.xlu0 %992
    %v995 = vmul.f32 %v988, %v993
    %997 = vrot.lane.b32.xlu0 %v995, 32
    %v998 = vpop.permute.xlu0 %997
    %v1000 = vadd.f32 %v990, %v998
    %v1001 = vtanh.pop %v1000
    %1003 = vrot.lane.b32.xlu0 %v1001, 64
    %v1004 = vpop.permute.xlu0 %1003
    %v1006 = vmul.f32 %v988, %v1004
    %v1007 = vpack.c.bf16 %v1006, %v1006
    %1009 = vrot.lane.b32.xlu0 %v941, 32
    %v1010 = vpop.permute.xlu0 %1009
    %v1012 = vsel %vm57, %v1010, 0
    %1014 = vmatprep.subr.bf16.mxu0 0
    %1015 = vmatpush1.bf16.msra.mxu0 %v451
    %1016 = vmatprep.subr.bf16.mxu0 0
    %1017 = vmatpush1.bf16.msra.mxu0 %v452
    %1018 = vmatprep.subr.bf16.mxu0 0
    %1019 = vmatpush1.bf16.msra.mxu0 0
    %1020 = vmatprep.subr.bf16.mxu0 0
    %1021 = vmatpush1.bf16.msra.mxu0 0
    %1022 = vmatprep.subr.bf16.mxu0 0
    %1023 = vmatpush1.bf16.msra.mxu0 0
    %1024 = vmatprep.subr.bf16.mxu0 0
    %1025 = vmatpush1.bf16.msra.mxu0 0
    %1026 = vmatprep.subr.bf16.mxu0 0
    %1027 = vmatpush1.bf16.msra.mxu0 0
    %1028 = vmatprep.subr.bf16.mxu0 0
    %1029 = vmatpush1.bf16.msra.mxu0 0
    %1030 = vmatprep.subr.bf16.mxu0 0
    %1031 = vmatpush1.bf16.msra.mxu0 0
    %1032 = vmatprep.subr.bf16.mxu0 0
    %1033 = vmatpush1.bf16.msra.mxu0 0
    %1034 = vmatprep.subr.bf16.mxu0 0
    %1035 = vmatpush1.bf16.msra.mxu0 0
    %1036 = vmatprep.subr.bf16.mxu0 0
    %1037 = vmatpush1.bf16.msra.mxu0 0
    %1038 = vmatprep.subr.bf16.mxu0 0
    %1039 = vmatpush1.bf16.msra.mxu0 0
    %1040 = vmatprep.subr.bf16.mxu0 0
    %1041 = vmatpush1.bf16.msra.mxu0 0
    %1042 = vmatprep.subr.bf16.mxu0 0
    %1043 = vmatpush1.bf16.msra.mxu0 0
    %1044 = vmatprep.subr.bf16.mxu0 0
    %1045 = vmatpush1.bf16.msra.mxu0 0
    %1046 = vmatprep.mubr.bf16.mxu0 0
    %1047 = vmatmul.mubr.bf16.gmra.mrb[0].mxu0 %v1012
    %v1048 = vpop.f32.mrb[0].mxu0
    %v1049 = vadd.f32 0.0, %v1048
    %v1050 = vpop.f32.mrb[0].mxu0
    %v1051 = vpop.f32.mrb[0].mxu0
    %v1052 = vpop.f32.mrb[0].mxu0
    %1053 = vdwg.mxu0
    %1055 = vrot.lane.b32.xlu0 %v1007, 32
    %v1056 = vpop.permute.xlu0 %1055
    %v1058 = vsel %vm57, %v1056, 0
    %1060 = vmatprep.subr.bf16.mxu0 0
    %1061 = vmatpush1.bf16.msra.mxu0 %v284
    %1062 = vmatprep.subr.bf16.mxu0 0
    %1063 = vmatpush1.bf16.msra.mxu0 %v285
    %1064 = vmatprep.subr.bf16.mxu0 0
    %1065 = vmatpush1.bf16.msra.mxu0 0
    %1066 = vmatprep.subr.bf16.mxu0 0
    %1067 = vmatpush1.bf16.msra.mxu0 0
    %1068 = vmatprep.subr.bf16.mxu0 0
    %1069 = vmatpush1.bf16.msra.mxu0 0
    %1070 = vmatprep.subr.bf16.mxu0 0
    %1071 = vmatpush1.bf16.msra.mxu0 0
    %1072 = vmatprep.subr.bf16.mxu0 0
    %1073 = vmatpush1.bf16.msra.mxu0 0
    %1074 = vmatprep.subr.bf16.mxu0 0
    %1075 = vmatpush1.bf16.msra.mxu0 0
    %1076 = vmatprep.subr.bf16.mxu0 0
    %1077 = vmatpush1.bf16.msra.mxu0 0
    %1078 = vmatprep.subr.bf16.mxu0 0
    %1079 = vmatpush1.bf16.msra.mxu0 0
    %1080 = vmatprep.subr.bf16.mxu0 0
    %1081 = vmatpush1.bf16.msra.mxu0 0
    %1082 = vmatprep.subr.bf16.mxu0 0
    %1083 = vmatpush1.bf16.msra.mxu0 0
    %1084 = vmatprep.subr.bf16.mxu0 0
    %1085 = vmatpush1.bf16.msra.mxu0 0
    %1086 = vmatprep.subr.bf16.mxu0 0
    %1087 = vmatpush1.bf16.msra.mxu0 0
    %1088 = vmatprep.subr.bf16.mxu0 0
    %1089 = vmatpush1.bf16.msra.mxu0 0
    %1090 = vmatprep.subr.bf16.mxu0 0
    %1091 = vmatpush1.bf16.msra.mxu0 0
    %1092 = vmatprep.mubr.bf16.mxu0 0
    %1093 = vmatmul.mubr.bf16.gmra.mrb[0].mxu0 %v1058
    %v1094 = vpop.f32.mrb[0].mxu0
    %v1095 = vadd.f32 %v1049, %v1094
    %v1096 = vpop.f32.mrb[0].mxu0
    %v1097 = vpop.f32.mrb[0].mxu0
    %v1098 = vpop.f32.mrb[0].mxu0
    %1099 = vdwg.mxu0
    %v1100 = vadd.f32 %v1095, %v248
    %v1101 = vxor.u32 %v1100, 2147483648
    %v1102 = vmul.f32 %v1101, 1.442695
    %v1103 = vpow.pop %v1102
    %v1104 = vadd.f32 %v1103, 1.0
    %v1105 = vrcp.pop %v1104
    %v1106 = vmul.f32 1.0, %v1105
    %v1107 = vtanh.pop %v1100
    %v1108 = vmul.f32 %v1106, %v934
    %1110 = vrot.lane.b32.xlu0 %v1107, 64
    %v1111 = vpop.permute.xlu0 %1110
    %v1113 = vmul.f32 %v1106, %v1111
    %1115 = vrot.lane.b32.xlu0 %v1113, 32
    %v1116 = vpop.permute.xlu0 %1115
    %v1118 = vadd.f32 %v1108, %v1116
    %v1119 = vtanh.pop %v1118
    %1121 = vrot.lane.b32.xlu0 %v1119, 64
    %v1122 = vpop.permute.xlu0 %1121
    %v1124 = vmul.f32 %v1106, %v1122
    %v1125 = vpack.c.bf16 %v1124, %v1124
    %1126 = vmatprep.subr.bf16.mxu0 0
    %1127 = vmatpush1.bf16.msra.mxu0 %v362
    %1128 = vmatprep.subr.bf16.mxu0 0
    %1129 = vmatpush1.bf16.msra.mxu0 %v363
    %1130 = vmatprep.subr.bf16.mxu0 0
    %1131 = vmatpush1.bf16.msra.mxu0 0
    %1132 = vmatprep.subr.bf16.mxu0 0
    %1133 = vmatpush1.bf16.msra.mxu0 0
    %1134 = vmatprep.subr.bf16.mxu0 0
    %1135 = vmatpush1.bf16.msra.mxu0 0
    %1136 = vmatprep.subr.bf16.mxu0 0
    %1137 = vmatpush1.bf16.msra.mxu0 0
    %1138 = vmatprep.subr.bf16.mxu0 0
    %1139 = vmatpush1.bf16.msra.mxu0 0
    %1140 = vmatprep.subr.bf16.mxu0 0
    %1141 = vmatpush1.bf16.msra.mxu0 0
    %1142 = vmatprep.subr.bf16.mxu0 0
    %1143 = vmatpush1.bf16.msra.mxu0 0
    %1144 = vmatprep.subr.bf16.mxu0 0
    %1145 = vmatpush1.bf16.msra.mxu0 0
    %1146 = vmatprep.subr.bf16.mxu0 0
    %1147 = vmatpush1.bf16.msra.mxu0 0
    %1148 = vmatprep.subr.bf16.mxu0 0
    %1149 = vmatpush1.bf16.msra.mxu0 0
    %1150 = vmatprep.subr.bf16.mxu0 0
    %1151 = vmatpush1.bf16.msra.mxu0 0
    %1152 = vmatprep.subr.bf16.mxu0 0
    %1153 = vmatpush1.bf16.msra.mxu0 0
    %1154 = vmatprep.subr.bf16.mxu0 0
    %1155 = vmatpush1.bf16.msra.mxu0 0
    %1156 = vmatprep.subr.bf16.mxu0 0
    %1157 = vmatpush1.bf16.msra.mxu0 0
    %1158 = vmatprep.mubr.bf16.mxu0 0
    %1159 = vmatmul.mubr.bf16.gmra.mrb[0].mxu0 %v1058
    %v1160 = vpop.f32.mrb[0].mxu0
    %v1161 = vadd.f32 0.0, %v1160
    %v1162 = vpop.f32.mrb[0].mxu0
    %v1163 = vpop.f32.mrb[0].mxu0
    %v1164 = vpop.f32.mrb[0].mxu0
    %1165 = vdwg.mxu0
    %v1166 = vadd.f32 %v232, %v1161
    %v1167 = vxor.u32 %v1166, 2147483648
    %v1168 = vmul.f32 %v1167, 1.442695
    %v1169 = vpow.pop %v1168
    %v1170 = vadd.f32 %v1169, 1.0
    %v1171 = vrcp.pop %v1170
    %v1172 = vmul.f32 1.0, %v1171
    %v1173 = vtanh.pop %v1166
    %v1174 = vmul.f32 %v1172, %v1000
    %1176 = vrot.lane.b32.xlu0 %v1173, 64
    %v1177 = vpop.permute.xlu0 %1176
    %v1179 = vmul.f32 %v1172, %v1177
    %1181 = vrot.lane.b32.xlu0 %v1179, 32
    %v1182 = vpop.permute.xlu0 %1181
    %v1184 = vadd.f32 %v1174, %v1182
    %v1185 = vtanh.pop %v1184
    %1187 = vrot.lane.b32.xlu0 %v1185, 64
    %v1188 = vpop.permute.xlu0 %1187
    %v1190 = vmul.f32 %v1172, %v1188
    %v1191 = vpack.c.bf16 %v1190, %v1190
    %1193 = vrot.lane.b32.xlu0 %v1125, 32
    %v1194 = vpop.permute.xlu0 %1193
    %v1196 = vsel %vm57, %v1194, 0
    %1198 = vmatprep.subr.bf16.mxu0 0
    %1199 = vmatpush1.bf16.msra.mxu0 %v451
    %1200 = vmatprep.subr.bf16.mxu0 0
    %1201 = vmatpush1.bf16.msra.mxu0 %v452
    %1202 = vmatprep.subr.bf16.mxu0 0
    %1203 = vmatpush1.bf16.msra.mxu0 0
    %1204 = vmatprep.subr.bf16.mxu0 0
    %1205 = vmatpush1.bf16.msra.mxu0 0
    %1206 = vmatprep.subr.bf16.mxu0 0
    %1207 = vmatpush1.bf16.msra.mxu0 0
    %1208 = vmatprep.subr.bf16.mxu0 0
    %1209 = vmatpush1.bf16.msra.mxu0 0
    %1210 = vmatprep.subr.bf16.mxu0 0
    %1211 = vmatpush1.bf16.msra.mxu0 0
    %1212 = vmatprep.subr.bf16.mxu0 0
    %1213 = vmatpush1.bf16.msra.mxu0 0
    %1214 = vmatprep.subr.bf16.mxu0 0
    %1215 = vmatpush1.bf16.msra.mxu0 0
    %1216 = vmatprep.subr.bf16.mxu0 0
    %1217 = vmatpush1.bf16.msra.mxu0 0
    %1218 = vmatprep.subr.bf16.mxu0 0
    %1219 = vmatpush1.bf16.msra.mxu0 0
    %1220 = vmatprep.subr.bf16.mxu0 0
    %1221 = vmatpush1.bf16.msra.mxu0 0
    %1222 = vmatprep.subr.bf16.mxu0 0
    %1223 = vmatpush1.bf16.msra.mxu0 0
    %1224 = vmatprep.subr.bf16.mxu0 0
    %1225 = vmatpush1.bf16.msra.mxu0 0
    %1226 = vmatprep.subr.bf16.mxu0 0
    %1227 = vmatpush1.bf16.msra.mxu0 0
    %1228 = vmatprep.subr.bf16.mxu0 0
    %1229 = vmatpush1.bf16.msra.mxu0 0
    %1230 = vmatprep.mubr.bf16.mxu0 0
    %1231 = vmatmul.mubr.bf16.gmra.mrb[0].mxu0 %v1196
    %v1232 = vpop.f32.mrb[0].mxu0
    %v1233 = vadd.f32 0.0, %v1232
    %v1234 = vpop.f32.mrb[0].mxu0
    %v1235 = vpop.f32.mrb[0].mxu0
    %v1236 = vpop.f32.mrb[0].mxu0
    %1237 = vdwg.mxu0
    %1239 = vrot.lane.b32.xlu0 %v1191, 32
    %v1240 = vpop.permute.xlu0 %1239
    %v1242 = vsel %vm57, %v1240, 0
    %1244 = vmatprep.subr.bf16.mxu0 0
    %1245 = vmatpush1.bf16.msra.mxu0 %v284
    %1246 = vmatprep.subr.bf16.mxu0 0
    %1247 = vmatpush1.bf16.msra.mxu0 %v285
    %1248 = vmatprep.subr.bf16.mxu0 0
    %1249 = vmatpush1.bf16.msra.mxu0 0
    %1250 = vmatprep.subr.bf16.mxu0 0
    %1251 = vmatpush1.bf16.msra.mxu0 0
    %1252 = vmatprep.subr.bf16.mxu0 0
    %1253 = vmatpush1.bf16.msra.mxu0 0
    %1254 = vmatprep.subr.bf16.mxu0 0
    %1255 = vmatpush1.bf16.msra.mxu0 0
    %1256 = vmatprep.subr.bf16.mxu0 0
    %1257 = vmatpush1.bf16.msra.mxu0 0
    %1258 = vmatprep.subr.bf16.mxu0 0
    %1259 = vmatpush1.bf16.msra.mxu0 0
    %1260 = vmatprep.subr.bf16.mxu0 0
    %1261 = vmatpush1.bf16.msra.mxu0 0
    %1262 = vmatprep.subr.bf16.mxu0 0
    %1263 = vmatpush1.bf16.msra.mxu0 0
    %1264 = vmatprep.subr.bf16.mxu0 0
    %1265 = vmatpush1.bf16.msra.mxu0 0
    %1266 = vmatprep.subr.bf16.mxu0 0
    %1267 = vmatpush1.bf16.msra.mxu0 0
    %1268 = vmatprep.subr.bf16.mxu0 0
    %1269 = vmatpush1.bf16.msra.mxu0 0
    %1270 = vmatprep.subr.bf16.mxu0 0
    %1271 = vmatpush1.bf16.msra.mxu0 0
    %1272 = vmatprep.subr.bf16.mxu0 0
    %1273 = vmatpush1.bf16.msra.mxu0 0
    %1274 = vmatprep.subr.bf16.mxu0 0
    %1275 = vmatpush1.bf16.msra.mxu0 0
    %1276 = vmatprep.mubr.bf16.mxu0 0
    %1277 = vmatmul.mubr.bf16.gmra.mrb[0].mxu0 %v1242
    %v1278 = vpop.f32.mrb[0].mxu0
    %v1279 = vadd.f32 %v1233, %v1278
    %v1280 = vpop.f32.mrb[0].mxu0
    %v1281 = vpop.f32.mrb[0].mxu0
    %v1282 = vpop.f32.mrb[0].mxu0
    %1283 = vdwg.mxu0
    %v1284 = vadd.f32 %v1279, %v248
    %v1285 = vxor.u32 %v1284, 2147483648
    %v1286 = vmul.f32 %v1285, 1.442695
    %v1287 = vpow.pop %v1286
    %v1288 = vadd.f32 %v1287, 1.0
    %v1289 = vrcp.pop %v1288
    %v1290 = vmul.f32 1.0, %v1289
    %v1291 = vtanh.pop %v1284
    %v1292 = vmul.f32 %v1290, %v1118
    %1294 = vrot.lane.b32.xlu0 %v1291, 64
    %v1295 = vpop.permute.xlu0 %1294
    %v1297 = vmul.f32 %v1290, %v1295
    %1299 = vrot.lane.b32.xlu0 %v1297, 32
    %v1300 = vpop.permute.xlu0 %1299
    %v1302 = vadd.f32 %v1292, %v1300
    %v1303 = vtanh.pop %v1302
    %1305 = vrot.lane.b32.xlu0 %v1303, 64
    %v1306 = vpop.permute.xlu0 %1305
    %v1308 = vmul.f32 %v1290, %v1306
    %v1309 = vpack.c.bf16 %v1308, %v1308
    %1310 = vmatprep.subr.bf16.mxu0 0
    %1311 = vmatpush1.bf16.msra.mxu0 %v362
    %1312 = vmatprep.subr.bf16.mxu0 0
    %1313 = vmatpush1.bf16.msra.mxu0 %v363
    %1314 = vmatprep.subr.bf16.mxu0 0
    %1315 = vmatpush1.bf16.msra.mxu0 0
    %1316 = vmatprep.subr.bf16.mxu0 0
    %1317 = vmatpush1.bf16.msra.mxu0 0
    %1318 = vmatprep.subr.bf16.mxu0 0
    %1319 = vmatpush1.bf16.msra.mxu0 0
    %1320 = vmatprep.subr.bf16.mxu0 0
    %1321 = vmatpush1.bf16.msra.mxu0 0
    %1322 = vmatprep.subr.bf16.mxu0 0
    %1323 = vmatpush1.bf16.msra.mxu0 0
    %1324 = vmatprep.subr.bf16.mxu0 0
    %1325 = vmatpush1.bf16.msra.mxu0 0
    %1326 = vmatprep.subr.bf16.mxu0 0
    %1327 = vmatpush1.bf16.msra.mxu0 0
    %1328 = vmatprep.subr.bf16.mxu0 0
    %1329 = vmatpush1.bf16.msra.mxu0 0
    %1330 = vmatprep.subr.bf16.mxu0 0
    %1331 = vmatpush1.bf16.msra.mxu0 0
    %1332 = vmatprep.subr.bf16.mxu0 0
    %1333 = vmatpush1.bf16.msra.mxu0 0
    %1334 = vmatprep.subr.bf16.mxu0 0
    %1335 = vmatpush1.bf16.msra.mxu0 0
    %1336 = vmatprep.subr.bf16.mxu0 0
    %1337 = vmatpush1.bf16.msra.mxu0 0
    %1338 = vmatprep.subr.bf16.mxu0 0
    %1339 = vmatpush1.bf16.msra.mxu0 0
    %1340 = vmatprep.subr.bf16.mxu0 0
    %1341 = vmatpush1.bf16.msra.mxu0 0
    %1342 = vmatprep.mubr.bf16.mxu0 0
    %1343 = vmatmul.mubr.bf16.gmra.mrb[0].mxu0 %v1242
    %v1344 = vpop.f32.mrb[0].mxu0
    %v1345 = vadd.f32 0.0, %v1344
    %v1346 = vpop.f32.mrb[0].mxu0
    %v1347 = vpop.f32.mrb[0].mxu0
    %v1348 = vpop.f32.mrb[0].mxu0
    %1349 = vdwg.mxu0
    %v1350 = vadd.f32 %v237, %v1345
    %v1351 = vxor.u32 %v1350, 2147483648
    %v1352 = vmul.f32 %v1351, 1.442695
    %v1353 = vpow.pop %v1352
    %v1354 = vadd.f32 %v1353, 1.0
    %v1355 = vrcp.pop %v1354
    %v1356 = vmul.f32 1.0, %v1355
    %v1357 = vtanh.pop %v1350
    %v1358 = vmul.f32 %v1356, %v1184
    %1360 = vrot.lane.b32.xlu0 %v1357, 64
    %v1361 = vpop.permute.xlu0 %1360
    %v1363 = vmul.f32 %v1356, %v1361
    %1365 = vrot.lane.b32.xlu0 %v1363, 32
    %v1366 = vpop.permute.xlu0 %1365
    %v1368 = vadd.f32 %v1358, %v1366
    %v1369 = vtanh.pop %v1368
    %1371 = vrot.lane.b32.xlu0 %v1369, 64
    %v1372 = vpop.permute.xlu0 %1371
    %v1374 = vmul.f32 %v1356, %v1372
    %v1375 = vpack.c.bf16 %v1374, %v1374
    %1377 = vrot.lane.b32.xlu0 %v1309, 32
    %v1378 = vpop.permute.xlu0 %1377
    %v1380 = vsel %vm57, %v1378, 0
    %1382 = vmatprep.subr.bf16.mxu0 0
    %1383 = vmatpush1.bf16.msra.mxu0 %v451
    %1384 = vmatprep.subr.bf16.mxu0 0
    %1385 = vmatpush1.bf16.msra.mxu0 %v452
    %1386 = vmatprep.subr.bf16.mxu0 0
    %1387 = vmatpush1.bf16.msra.mxu0 0
    %1388 = vmatprep.subr.bf16.mxu0 0
    %1389 = vmatpush1.bf16.msra.mxu0 0
    %1390 = vmatprep.subr.bf16.mxu0 0
    %1391 = vmatpush1.bf16.msra.mxu0 0
    %1392 = vmatprep.subr.bf16.mxu0 0
    %1393 = vmatpush1.bf16.msra.mxu0 0
    %1394 = vmatprep.subr.bf16.mxu0 0
    %1395 = vmatpush1.bf16.msra.mxu0 0
    %1396 = vmatprep.subr.bf16.mxu0 0
    %1397 = vmatpush1.bf16.msra.mxu0 0
    %1398 = vmatprep.subr.bf16.mxu0 0
    %1399 = vmatpush1.bf16.msra.mxu0 0
    %1400 = vmatprep.subr.bf16.mxu0 0
    %1401 = vmatpush1.bf16.msra.mxu0 0
    %1402 = vmatprep.subr.bf16.mxu0 0
    %1403 = vmatpush1.bf16.msra.mxu0 0
    %1404 = vmatprep.subr.bf16.mxu0 0
    %1405 = vmatpush1.bf16.msra.mxu0 0
    %1406 = vmatprep.subr.bf16.mxu0 0
    %1407 = vmatpush1.bf16.msra.mxu0 0
    %1408 = vmatprep.subr.bf16.mxu0 0
    %1409 = vmatpush1.bf16.msra.mxu0 0
    %1410 = vmatprep.subr.bf16.mxu0 0
    %1411 = vmatpush1.bf16.msra.mxu0 0
    %1412 = vmatprep.subr.bf16.mxu0 0
    %1413 = vmatpush1.bf16.msra.mxu0 0
    %1414 = vmatprep.mubr.bf16.mxu0 0
    %1415 = vmatmul.mubr.bf16.gmra.mrb[0].mxu0 %v1380
    %v1416 = vpop.f32.mrb[0].mxu0
    %v1417 = vadd.f32 0.0, %v1416
    %v1418 = vpop.f32.mrb[0].mxu0
    %v1419 = vpop.f32.mrb[0].mxu0
    %v1420 = vpop.f32.mrb[0].mxu0
    %1421 = vdwg.mxu0
    %1423 = vrot.lane.b32.xlu0 %v1375, 32
    %v1424 = vpop.permute.xlu0 %1423
    %v1426 = vsel %vm57, %v1424, 0
    %1428 = vmatprep.subr.bf16.mxu0 0
    %1429 = vmatpush1.bf16.msra.mxu0 %v284
    %1430 = vmatprep.subr.bf16.mxu0 0
    %1431 = vmatpush1.bf16.msra.mxu0 %v285
    %1432 = vmatprep.subr.bf16.mxu0 0
    %1433 = vmatpush1.bf16.msra.mxu0 0
    %1434 = vmatprep.subr.bf16.mxu0 0
    %1435 = vmatpush1.bf16.msra.mxu0 0
    %1436 = vmatprep.subr.bf16.mxu0 0
    %1437 = vmatpush1.bf16.msra.mxu0 0
    %1438 = vmatprep.subr.bf16.mxu0 0
    %1439 = vmatpush1.bf16.msra.mxu0 0
    %1440 = vmatprep.subr.bf16.mxu0 0
    %1441 = vmatpush1.bf16.msra.mxu0 0
    %1442 = vmatprep.subr.bf16.mxu0 0
    %1443 = vmatpush1.bf16.msra.mxu0 0
    %1444 = vmatprep.subr.bf16.mxu0 0
    %1445 = vmatpush1.bf16.msra.mxu0 0
    %1446 = vmatprep.subr.bf16.mxu0 0
    %1447 = vmatpush1.bf16.msra.mxu0 0
    %1448 = vmatprep.subr.bf16.mxu0 0
    %1449 = vmatpush1.bf16.msra.mxu0 0
    %1450 = vmatprep.subr.bf16.mxu0 0
    %1451 = vmatpush1.bf16.msra.mxu0 0
    %1452 = vmatprep.subr.bf16.mxu0 0
    %1453 = vmatpush1.bf16.msra.mxu0 0
    %1454 = vmatprep.subr.bf16.mxu0 0
    %1455 = vmatpush1.bf16.msra.mxu0 0
    %1456 = vmatprep.subr.bf16.mxu0 0
    %1457 = vmatpush1.bf16.msra.mxu0 0
    %1458 = vmatprep.subr.bf16.mxu0 0
    %1459 = vmatpush1.bf16.msra.mxu0 0
    %1460 = vmatprep.mubr.bf16.mxu0 0
    %1461 = vmatmul.mubr.bf16.gmra.mrb[0].mxu0 %v1426
    %v1462 = vpop.f32.mrb[0].mxu0
    %v1463 = vadd.f32 %v1417, %v1462
    %v1464 = vpop.f32.mrb[0].mxu0
    %v1465 = vpop.f32.mrb[0].mxu0
    %v1466 = vpop.f32.mrb[0].mxu0
    %1467 = vdwg.mxu0
    %v1468 = vadd.f32 %v1463, %v248
    %v1469 = vxor.u32 %v1468, 2147483648
    %v1470 = vmul.f32 %v1469, 1.442695
    %v1471 = vpow.pop %v1470
    %v1472 = vadd.f32 %v1471, 1.0
    %v1473 = vrcp.pop %v1472
    %v1474 = vmul.f32 1.0, %v1473
    %v1475 = vtanh.pop %v1468
    %v1476 = vmul.f32 %v1474, %v1302
    %1478 = vrot.lane.b32.xlu0 %v1475, 64
    %v1479 = vpop.permute.xlu0 %1478
    %v1481 = vmul.f32 %v1474, %v1479
    %1483 = vrot.lane.b32.xlu0 %v1481, 32
    %v1484 = vpop.permute.xlu0 %1483
    %v1486 = vadd.f32 %v1476, %v1484
    %v1487 = vtanh.pop %v1486
    %1489 = vrot.lane.b32.xlu0 %v1487, 64
    %v1490 = vpop.permute.xlu0 %1489
    %v1492 = vmul.f32 %v1474, %v1490
    %v1493 = vpack.c.bf16 %v1492, %v1492
    %1494 = vmatprep.subr.bf16.mxu0 0
    %1495 = vmatpush1.bf16.msra.mxu0 %v362
    %1496 = vmatprep.subr.bf16.mxu0 0
    %1497 = vmatpush1.bf16.msra.mxu0 %v363
    %1498 = vmatprep.subr.bf16.mxu0 0
    %1499 = vmatpush1.bf16.msra.mxu0 0
    %1500 = vmatprep.subr.bf16.mxu0 0
    %1501 = vmatpush1.bf16.msra.mxu0 0
    %1502 = vmatprep.subr.bf16.mxu0 0
    %1503 = vmatpush1.bf16.msra.mxu0 0
    %1504 = vmatprep.subr.bf16.mxu0 0
    %1505 = vmatpush1.bf16.msra.mxu0 0
    %1506 = vmatprep.subr.bf16.mxu0 0
    %1507 = vmatpush1.bf16.msra.mxu0 0
    %1508 = vmatprep.subr.bf16.mxu0 0
    %1509 = vmatpush1.bf16.msra.mxu0 0
    %1510 = vmatprep.subr.bf16.mxu0 0
    %1511 = vmatpush1.bf16.msra.mxu0 0
    %1512 = vmatprep.subr.bf16.mxu0 0
    %1513 = vmatpush1.bf16.msra.mxu0 0
    %1514 = vmatprep.subr.bf16.mxu0 0
    %1515 = vmatpush1.bf16.msra.mxu0 0
    %1516 = vmatprep.subr.bf16.mxu0 0
    %1517 = vmatpush1.bf16.msra.mxu0 0
    %1518 = vmatprep.subr.bf16.mxu0 0
    %1519 = vmatpush1.bf16.msra.mxu0 0
    %1520 = vmatprep.subr.bf16.mxu0 0
    %1521 = vmatpush1.bf16.msra.mxu0 0
    %1522 = vmatprep.subr.bf16.mxu0 0
    %1523 = vmatpush1.bf16.msra.mxu0 0
    %1524 = vmatprep.subr.bf16.mxu0 0
    %1525 = vmatpush1.bf16.msra.mxu0 0
    %1526 = vmatprep.mubr.bf16.mxu0 0
    %1527 = vmatmul.mubr.bf16.gmra.mrb[0].mxu0 %v1426
    %v1528 = vpop.f32.mrb[0].mxu0
    %v1529 = vadd.f32 0.0, %v1528
    %v1530 = vpop.f32.mrb[0].mxu0
    %v1531 = vpop.f32.mrb[0].mxu0
    %v1532 = vpop.f32.mrb[0].mxu0
    %1533 = vdwg.mxu0
    %v1534 = vadd.f32 %v240, %v1529
    %v1535 = vxor.u32 %v1534, 2147483648
    %v1536 = vmul.f32 %v1535, 1.442695
    %v1537 = vpow.pop %v1536
    %v1538 = vadd.f32 %v1537, 1.0
    %v1539 = vrcp.pop %v1538
    %v1540 = vmul.f32 1.0, %v1539
    %v1541 = vtanh.pop %v1534
    %v1542 = vmul.f32 %v1540, %v1368
    %1544 = vrot.lane.b32.xlu0 %v1541, 64
    %v1545 = vpop.permute.xlu0 %1544
    %v1547 = vmul.f32 %v1540, %v1545
    %1549 = vrot.lane.b32.xlu0 %v1547, 32
    %v1550 = vpop.permute.xlu0 %1549
    %v1552 = vadd.f32 %v1542, %v1550
    %v1553 = vtanh.pop %v1552
    %1555 = vrot.lane.b32.xlu0 %v1553, 64
    %v1556 = vpop.permute.xlu0 %1555
    %v1558 = vmul.f32 %v1540, %v1556
    %v1559 = vpack.c.bf16 %v1558, %v1558
    %1561 = vrot.lane.b32.xlu0 %v1493, 32
    %v1562 = vpop.permute.xlu0 %1561
    %v1564 = vsel %vm57, %v1562, 0
    %1566 = vmatprep.subr.bf16.mxu0 0
    %1567 = vmatpush1.bf16.msra.mxu0 %v451
    %1568 = vmatprep.subr.bf16.mxu0 0
    %1569 = vmatpush1.bf16.msra.mxu0 %v452
    %1570 = vmatprep.subr.bf16.mxu0 0
    %1571 = vmatpush1.bf16.msra.mxu0 0
    %1572 = vmatprep.subr.bf16.mxu0 0
    %1573 = vmatpush1.bf16.msra.mxu0 0
    %1574 = vmatprep.subr.bf16.mxu0 0
    %1575 = vmatpush1.bf16.msra.mxu0 0
    %1576 = vmatprep.subr.bf16.mxu0 0
    %1577 = vmatpush1.bf16.msra.mxu0 0
    %1578 = vmatprep.subr.bf16.mxu0 0
    %1579 = vmatpush1.bf16.msra.mxu0 0
    %1580 = vmatprep.subr.bf16.mxu0 0
    %1581 = vmatpush1.bf16.msra.mxu0 0
    %1582 = vmatprep.subr.bf16.mxu0 0
    %1583 = vmatpush1.bf16.msra.mxu0 0
    %1584 = vmatprep.subr.bf16.mxu0 0
    %1585 = vmatpush1.bf16.msra.mxu0 0
    %1586 = vmatprep.subr.bf16.mxu0 0
    %1587 = vmatpush1.bf16.msra.mxu0 0
    %1588 = vmatprep.subr.bf16.mxu0 0
    %1589 = vmatpush1.bf16.msra.mxu0 0
    %1590 = vmatprep.subr.bf16.mxu0 0
    %1591 = vmatpush1.bf16.msra.mxu0 0
    %1592 = vmatprep.subr.bf16.mxu0 0
    %1593 = vmatpush1.bf16.msra.mxu0 0
    %1594 = vmatprep.subr.bf16.mxu0 0
    %1595 = vmatpush1.bf16.msra.mxu0 0
    %1596 = vmatprep.subr.bf16.mxu0 0
    %1597 = vmatpush1.bf16.msra.mxu0 0
    %1598 = vmatprep.mubr.bf16.mxu0 0
    %1599 = vmatmul.mubr.bf16.gmra.mrb[0].mxu0 %v1564
    %v1600 = vpop.f32.mrb[0].mxu0
    %v1601 = vadd.f32 0.0, %v1600
    %v1602 = vpop.f32.mrb[0].mxu0
    %v1603 = vpop.f32.mrb[0].mxu0
    %v1604 = vpop.f32.mrb[0].mxu0
    %1605 = vdwg.mxu0
    %1607 = vrot.lane.b32.xlu0 %v1559, 32
    %v1608 = vpop.permute.xlu0 %1607
    %v1610 = vsel %vm57, %v1608, 0
    %1612 = vmatprep.subr.bf16.mxu0 0
    %1613 = vmatpush1.bf16.msra.mxu0 %v284
    %1614 = vmatprep.subr.bf16.mxu0 0
    %1615 = vmatpush1.bf16.msra.mxu0 %v285
    %1616 = vmatprep.subr.bf16.mxu0 0
    %1617 = vmatpush1.bf16.msra.mxu0 0
    %1618 = vmatprep.subr.bf16.mxu0 0
    %1619 = vmatpush1.bf16.msra.mxu0 0
    %1620 = vmatprep.subr.bf16.mxu0 0
    %1621 = vmatpush1.bf16.msra.mxu0 0
    %1622 = vmatprep.subr.bf16.mxu0 0
    %1623 = vmatpush1.bf16.msra.mxu0 0
    %1624 = vmatprep.subr.bf16.mxu0 0
    %1625 = vmatpush1.bf16.msra.mxu0 0
    %1626 = vmatprep.subr.bf16.mxu0 0
    %1627 = vmatpush1.bf16.msra.mxu0 0
    %1628 = vmatprep.subr.bf16.mxu0 0
    %1629 = vmatpush1.bf16.msra.mxu0 0
    %1630 = vmatprep.subr.bf16.mxu0 0
    %1631 = vmatpush1.bf16.msra.mxu0 0
    %1632 = vmatprep.subr.bf16.mxu0 0
    %1633 = vmatpush1.bf16.msra.mxu0 0
    %1634 = vmatprep.subr.bf16.mxu0 0
    %1635 = vmatpush1.bf16.msra.mxu0 0
    %1636 = vmatprep.subr.bf16.mxu0 0
    %1637 = vmatpush1.bf16.msra.mxu0 0
    %1638 = vmatprep.subr.bf16.mxu0 0
    %1639 = vmatpush1.bf16.msra.mxu0 0
    %1640 = vmatprep.subr.bf16.mxu0 0
    %1641 = vmatpush1.bf16.msra.mxu0 0
    %1642 = vmatprep.subr.bf16.mxu0 0
    %1643 = vmatpush1.bf16.msra.mxu0 0
    %1644 = vmatprep.mubr.bf16.mxu0 0
    %1645 = vmatmul.mubr.bf16.gmra.mrb[0].mxu0 %v1610
    %v1646 = vpop.f32.mrb[0].mxu0
    %v1647 = vadd.f32 %v1601, %v1646
    %v1648 = vpop.f32.mrb[0].mxu0
    %v1649 = vpop.f32.mrb[0].mxu0
    %v1650 = vpop.f32.mrb[0].mxu0
    %1651 = vdwg.mxu0
    %v1652 = vadd.f32 %v1647, %v248
    %v1653 = vxor.u32 %v1652, 2147483648
    %v1654 = vmul.f32 %v1653, 1.442695
    %v1655 = vpow.pop %v1654
    %v1656 = vadd.f32 %v1655, 1.0
    %v1657 = vrcp.pop %v1656
    %v1658 = vmul.f32 1.0, %v1657
    %v1659 = vtanh.pop %v1652
    %v1660 = vmul.f32 %v1658, %v1486
    %1662 = vrot.lane.b32.xlu0 %v1659, 64
    %v1663 = vpop.permute.xlu0 %1662
    %v1665 = vmul.f32 %v1658, %v1663
    %1667 = vrot.lane.b32.xlu0 %v1665, 32
    %v1668 = vpop.permute.xlu0 %1667
    %v1670 = vadd.f32 %v1660, %v1668
    %v1671 = vtanh.pop %v1670
    %1673 = vrot.lane.b32.xlu0 %v1671, 64
    %v1674 = vpop.permute.xlu0 %1673
    %v1676 = vmul.f32 %v1658, %v1674
    %v1677 = vpack.c.bf16 %v1676, %v1676
    %v1678 = vld [vmem:[%s8] sm:$0xf]
    %v1679 = vld [vmem:[%s8 + $0x4] sm:$0xf]
    %v1680 = vld [vmem:[%s8 + $0x8] sm:$0xf]
    %v1681 = vld [vmem:[%s8 + $0xc] sm:$0xf]
    %v1682 = vld [vmem:[%s9] sm:$0x1]
    %v1684 = vlaneseq
    %v1685 = vshrl.u32 %v1684, 7
    %v1686 = vsub.s32 0, %v1685
    %v1687 = vrot.slane %v1682, %v1686
    %1690 = vrot.lane.b32.xlu0 %v1677, 32
    %v1691 = vpop.permute.xlu0 %1690
    %v1696 = vunpack.c.l.b16 %v1678
    %v1697 = vunpack.c.l.b16 %v1679
    %v1698 = vunpack.c.l.b16 %v1680
    %v1699 = vunpack.c.l.b16 %v1681
    %v1700 = vpack.c.b16 %v1697, %v1696
    %v1701 = vpack.c.b16 %v1699, %v1698
    %v1705 = vsel %vm57, %v1691, 0
    %1707 = vmatprep.subr.bf16.mxu0 0
    %1708 = vmatpush1.bf16.msra.mxu0 %v1700
    %1709 = vmatprep.subr.bf16.mxu0 0
    %1710 = vmatpush1.bf16.msra.mxu0 %v1701
    %1711 = vmatprep.subr.bf16.mxu0 0
    %1712 = vmatpush1.bf16.msra.mxu0 0
    %1713 = vmatprep.subr.bf16.mxu0 0
    %1714 = vmatpush1.bf16.msra.mxu0 0
    %1715 = vmatprep.subr.bf16.mxu0 0
    %1716 = vmatpush1.bf16.msra.mxu0 0
    %1717 = vmatprep.subr.bf16.mxu0 0
    %1718 = vmatpush1.bf16.msra.mxu0 0
    %1719 = vmatprep.subr.bf16.mxu0 0
    %1720 = vmatpush1.bf16.msra.mxu0 0
    %1721 = vmatprep.subr.bf16.mxu0 0
    %1722 = vmatpush1.bf16.msra.mxu0 0
    %1723 = vmatprep.subr.bf16.mxu0 0
    %1724 = vmatpush1.bf16.msra.mxu0 0
    %1725 = vmatprep.subr.bf16.mxu0 0
    %1726 = vmatpush1.bf16.msra.mxu0 0
    %1727 = vmatprep.subr.bf16.mxu0 0
    %1728 = vmatpush1.bf16.msra.mxu0 0
    %1729 = vmatprep.subr.bf16.mxu0 0
    %1730 = vmatpush1.bf16.msra.mxu0 0
    %1731 = vmatprep.subr.bf16.mxu0 0
    %1732 = vmatpush1.bf16.msra.mxu0 0
    %1733 = vmatprep.subr.bf16.mxu0 0
    %1734 = vmatpush1.bf16.msra.mxu0 0
    %1735 = vmatprep.subr.bf16.mxu0 0
    %1736 = vmatpush1.bf16.msra.mxu0 0
    %1737 = vmatprep.subr.bf16.mxu0 0
    %1738 = vmatpush1.bf16.msra.mxu0 0
    %1739 = vmatprep.mubr.bf16.mxu0 0
    %1740 = vmatmul.mubr.bf16.gmra.mrb[0].mxu0 %v1705
    %v1741 = vpop.f32.mrb[0].mxu0
    %v1742 = vadd.f32 %v1687, %v1741
    %v1743 = vpop.f32.mrb[0].mxu0
    %v1744 = vpop.f32.mrb[0].mxu0
    %v1745 = vpop.f32.mrb[0].mxu0
    %1746 = vdwg.mxu0
    %v1747 = vmax.f32 %v1742, 0.0
    %v1748 = vld [vmem:[%s10] sm:$0x1]
    %v1750 = vlaneseq
    %v1751 = vshrl.u32 %v1750, 7
    %v1752 = vsub.s32 0, %v1751
    %v1753 = vrot.slane %v1748, %v1752
    %v1755 = vmul.f32 %v1747, %v1753
    %v1756 = vsel %vm57, %v1755, 0.0
    %1757 = vadd.xlane.f32.xlu0 %v1756
    %v1758 = vpop.xlane.xlu0 %1757
    %v1759 = vld [vmem:[#allocation3] sm:$0x1]
    %v1761 = vlaneseq
    %v1762 = vshrl.u32 %v1761, 7
    %v1763 = vsub.s32 0, %v1762
    %v1764 = vrot.slane %v1759, %v1763
    %v1766 = vadd.f32 %v1758, %v1764
    %vm1767 = vcmask 1024
    %1768 = vst.msk [vmem:[%s12] sm:$0x3] %vm1767, %v1766
    // Predicated region
    $region54: #{lstm_torch_nn_forward.1} parent=1 // pred_check
      _
    $region55: #{lstm_torch_nn_forward.1} parent=1 // pred_check_branch
      %1770 = sbr.rel (0) target = $region57
    $region56: #{lstm_torch_nn_forward.1} parent=1 // pred_region
      _
    $region57: #{lstm_torch_nn_forward.1} parent=1 // pred_fallthru
      _
    // Predicated region
    $region58: #{lstm_torch_nn_forward.1} parent=1 // pred_check
      _
    $region59: #{lstm_torch_nn_forward.1} parent=1 // pred_check_branch
      %1772 = sbr.rel (0) target = $region61
    $region60: #{lstm_torch_nn_forward.1} parent=1 // pred_region
      _
    $region61: #{lstm_torch_nn_forward.1} parent=1 // pred_fallthru
      _
    %1773 = vsyncpa [#allocation5], 1

</llo_original>
